<compile_context>
chip_gen: v6e
topology: v6e:2x2x1
jax: 0.10.0
libtpu: 0.0.40
codegen_flags: <defaults>
</compile_context>

<pallas_src>
import jax
import jax.numpy as jnp
from jax import lax
from jax.experimental import pallas as pl
from jax.experimental.pallas import tpu as pltpu


def _round_up(x, m):
    return (x + m - 1) // m * m


# ---------------------------------------------------------------------------
# Kernels
# ---------------------------------------------------------------------------

def gru_kernel(x_ref, wih_ref, bih_ref, whh_ref, bhhn_ref, h_out_ref, gi_ref):
    """Full GRU over the sequence in one invocation.

    x_ref    : (T*Bp, Ep)   bf16  all timesteps stacked along sublanes
    wih_ref  : (Ep, 3*Hp)   bf16  gate blocks lane-aligned at 0 / Hp / 2Hp
    bih_ref  : (1, 3*Hp)    f32   b_ih with b_hh pre-folded for r, z gates
    whh_ref  : (Hp, 3*Hp)   bf16
    bhhn_ref : (1, Hp)      f32   b_hh of the n gate (multiplied by r)
    h_out_ref: (Bp, Hp)     f32   final hidden state
    gi_ref   : (T*Bp, 3*Hp) f32   VMEM scratch: precomputed input projections
    """
    hp3 = gi_ref.shape[1]
    hp = hp3 // 3
    bp = h_out_ref.shape[0]
    t_steps = x_ref.shape[0] // bp

    # Phase 1: one big MXU matmul for every timestep's input projection.
    gi_ref[...] = (
        jnp.dot(x_ref[...], wih_ref[...], preferred_element_type=jnp.float32)
        + bih_ref[...])

    # Phase 2: serial recurrence — only h @ W_hh^T remains per step.
    bhh_n = bhhn_ref[...]

    def step(t, h):
        row = pl.multiple_of(t * bp, bp)
        gi_t = gi_ref[pl.ds(row, bp), :]                         # (Bp, 3*Hp)
        gh = jnp.dot(h.astype(jnp.bfloat16), whh_ref[...],
                     preferred_element_type=jnp.float32)          # (Bp, 3*Hp)
        r = jax.nn.sigmoid(gi_t[:, 0:hp] + gh[:, 0:hp])
        z = jax.nn.sigmoid(gi_t[:, hp:2 * hp] + gh[:, hp:2 * hp])
        n = jnp.tanh(gi_t[:, 2 * hp:] + r * (gh[:, 2 * hp:] + bhh_n))
        return (1.0 - z) * n + z * h

    h0 = jnp.zeros((bp, hp), jnp.float32)
    h_out_ref[...] = lax.fori_loop(0, t_steps, step, h0, unroll=True)


def fc_kernel(h_ref, w_ref, b_ref, o_ref):
    """Final linear layer on the last hidden state, tiled over vocab."""
    o_ref[...] = (
        jnp.dot(h_ref[...].astype(jnp.bfloat16), w_ref[...],
                preferred_element_type=jnp.float32)
        + b_ref[...])


# ---------------------------------------------------------------------------
# Parameter re-layout (done once) and forward pass
# ---------------------------------------------------------------------------

def prepare_kernel_params(params):
    """Pad & re-layout PyTorch-style GRU params for the TPU kernels."""
    wih_t, whh_t = params["wih_t"], params["whh_t"]
    bih, bhh = params["bih"], params["bhh"]
    fcw_t, fcb = params["fcw_t"], params["fcb"]
    E = wih_t.shape[0]
    H = whh_t.shape[0]
    V = fcw_t.shape[1]
    EP, HP, VP = _round_up(E, 128), _round_up(H, 128), _round_up(V, 128)

    wih_p = jnp.zeros((EP, 3 * HP), jnp.float32)
    whh_p = jnp.zeros((HP, 3 * HP), jnp.float32)
    for g in range(3):  # gate blocks lane-aligned at 0 / HP / 2HP
        wih_p = wih_p.at[:E, g * HP:g * HP + H].set(wih_t[:, g * H:(g + 1) * H])
        whh_p = whh_p.at[:H, g * HP:g * HP + H].set(whh_t[:, g * H:(g + 1) * H])

    bih_p = jnp.zeros((1, 3 * HP), jnp.float32)
    bih_p = bih_p.at[:, 0 * HP:0 * HP + H].set(bih[:, 0:H] + bhh[:, 0:H])          # r
    bih_p = bih_p.at[:, 1 * HP:1 * HP + H].set(bih[:, H:2 * H] + bhh[:, H:2 * H])  # z
    bih_p = bih_p.at[:, 2 * HP:2 * HP + H].set(bih[:, 2 * H:3 * H])                # n
    bhhn_p = jnp.zeros((1, HP), jnp.float32).at[:, :H].set(bhh[:, 2 * H:3 * H])

    fcw_p = jnp.zeros((HP, VP), jnp.float32).at[:H, :V].set(fcw_t)
    fcb_p = jnp.zeros((1, VP), jnp.float32).at[:, :V].set(fcb)

    return {
        "embedding": params["embedding"],
        "wih": wih_p.astype(jnp.bfloat16),
        "whh": whh_p.astype(jnp.bfloat16),
        "bih": bih_p,
        "bhh_n": bhhn_p,
        "fcw": fcw_p.astype(jnp.bfloat16),
        "fcb": fcb_p,
        "dims": {"E": E, "H": H, "V": V, "EP": EP, "HP": HP, "VP": VP},
    }


def gru_model_forward(x_ids, kp):
    """x_ids: (B, T) int32 token ids -> logits (B, vocab_size)."""
    d = kp["dims"]
    E, H, V = d["E"], d["H"], d["V"]
    EP, HP, VP = d["EP"], d["HP"], d["VP"]
    B, T = x_ids.shape
    BP = _round_up(max(B, 8), 8)

    # Embedding lookup (data-dependent gather) stays in XLA glue.
    emb = jnp.take(kp["embedding"], x_ids, axis=0)               # (B, T, E)
    x_seq = jnp.transpose(emb, (1, 0, 2)).astype(jnp.bfloat16)   # (T, B, E)
    x_pad = jnp.zeros((T, BP, EP), jnp.bfloat16).at[:, :B, :E].set(x_seq)
    x_flat = x_pad.reshape(T * BP, EP)

    h_final = pl.pallas_call(
        gru_kernel,
        out_shape=jax.ShapeDtypeStruct((BP, HP), jnp.float32),
        grid_spec=pltpu.PrefetchScalarGridSpec(
            num_scalar_prefetch=0,
            grid=(1,),
            in_specs=[
                pl.BlockSpec((T * BP, EP), lambda i: (0, 0)),    # x (all steps)
                pl.BlockSpec((EP, 3 * HP), lambda i: (0, 0)),    # W_ih^T
                pl.BlockSpec((1, 3 * HP), lambda i: (0, 0)),     # folded bias
                pl.BlockSpec((HP, 3 * HP), lambda i: (0, 0)),    # W_hh^T
                pl.BlockSpec((1, HP), lambda i: (0, 0)),         # b_hh (n gate)
            ],
            out_specs=pl.BlockSpec((BP, HP), lambda i: (0, 0)),
            scratch_shapes=[pltpu.VMEM((T * BP, 3 * HP), jnp.float32)],
        ),
        compiler_params=pltpu.CompilerParams(
            dimension_semantics=("arbitrary",)),
    )(x_flat, kp["wih"], kp["bih"], kp["whh"], kp["bhh_n"])

    # Vocab projection on the final hidden state, tiled over padded vocab.
    TV = 128
    logits_pad = pl.pallas_call(
        fc_kernel,
        out_shape=jax.ShapeDtypeStruct((BP, VP), jnp.float32),
        grid_spec=pltpu.PrefetchScalarGridSpec(
            num_scalar_prefetch=0,
            grid=(VP // TV,),
            in_specs=[
                pl.BlockSpec((BP, HP), lambda j: (0, 0)),
                pl.BlockSpec((HP, TV), lambda j: (0, j)),
                pl.BlockSpec((1, TV), lambda j: (0, j)),
            ],
            out_specs=pl.BlockSpec((BP, TV), lambda j: (0, j)),
        ),
        compiler_params=pltpu.CompilerParams(
            dimension_semantics=("parallel",)),
    )(h_final, kp["fcw"], kp["fcb"])

    return logits_pad[:B, :V]


# ---------------------------------------------------------------------------
# Pure-JAX fp32 reference (matches PyTorch nn.GRU semantics) and params
# ---------------------------------------------------------------------------

def reference_forward(x_ids, params):
    emb = jnp.take(params["embedding"], x_ids, axis=0)  # (B, T, E)
    B, T, E = emb.shape
    H = params["whh_t"].shape[0]
    h = jnp.zeros((B, H), jnp.float32)
    for t in range(T):
        x_t = emb[:, t, :]
        gi = x_t @ params["wih_t"] + params["bih"]
        gh = h @ params["whh_t"] + params["bhh"]
        i_r, i_z, i_n = gi[:, :H], gi[:, H:2 * H], gi[:, 2 * H:]
        h_r, h_z, h_n = gh[:, :H], gh[:, H:2 * H], gh[:, 2 * H:]
        r = jax.nn.sigmoid(i_r + h_r)
        z = jax.nn.sigmoid(i_z + h_z)
        n = jnp.tanh(i_n + r * h_n)
        h = (1.0 - z) * n + z * h
    return h @ params["fcw_t"] + params["fcb"]


def init_params(key, vocab_size, emb_dim, hid_dim):
    ks = jax.random.split(key, 7)
    scale = 0.1
    return {
        "embedding": scale * jax.random.normal(ks[0], (vocab_size, emb_dim), jnp.float32),
        # PyTorch GRU weights are (3H, E)/(3H, H); we store the transposes.
        "wih_t": scale * jax.random.normal(ks[1], (emb_dim, 3 * hid_dim), jnp.float32),
        "whh_t": scale * jax.random.normal(ks[2], (hid_dim, 3 * hid_dim), jnp.float32),
        "bih": scale * jax.random.normal(ks[3], (1, 3 * hid_dim), jnp.float32),
        "bhh": scale * jax.random.normal(ks[4], (1, 3 * hid_dim), jnp.float32),
        "fcw_t": scale * jax.random.normal(ks[5], (hid_dim, vocab_size), jnp.float32),
        "fcb": scale * jax.random.normal(ks[6], (1, vocab_size), jnp.float32),
    }


if __name__ == "__main__":
    vocab_size, emb_dim, hid_dim = 64, 32, 32
    batch, seq = 2, 8

    key = jax.random.PRNGKey(0)
    k_param, k_ids = jax.random.split(key)
    params = init_params(k_param, vocab_size, emb_dim, hid_dim)
    x_ids = jax.random.randint(k_ids, (batch, seq), 0, vocab_size, dtype=jnp.int32)

    kparams = prepare_kernel_params(params)

    logits = jax.block_until_ready(gru_model_forward(x_ids, kparams))
    ref = jax.block_until_ready(reference_forward(x_ids, params))

    assert logits.shape == (batch, vocab_size)
    # bf16 matmuls with fp32 accumulation -> looser tolerance than pure fp32.
    assert jnp.allclose(logits, ref, rtol=1e-2, atol=1e-2), (
        float(jnp.max(jnp.abs(logits - ref))))
    print("KERNEL_OK")
</pallas_src>

<mosaic_0001>
module attributes {stable_mosaic.version = 11 : i64} {
  func.func @gru_kernel(%arg0: i32, %arg1: memref<64x128xbf16, #tpu.memory_space<vmem>>, %arg2: memref<128x384xbf16, #tpu.memory_space<vmem>>, %arg3: memref<1x384xf32, #tpu.memory_space<vmem>>, %arg4: memref<128x384xbf16, #tpu.memory_space<vmem>>, %arg5: memref<1x128xf32, #tpu.memory_space<vmem>>, %arg6: memref<8x128xf32, #tpu.memory_space<vmem>>, %arg7: memref<64x384xf32, #tpu.memory_space<vmem>>) attributes {dimension_semantics = [#tpu.dimension_semantics<arbitrary>], iteration_bounds = array<i64: 1>, scalar_prefetch = 0 : i64, scratch_operands = 1 : i64, tpu.core_type = #tpu.core_type<tc>, window_params = [{pipeline_mode = #tpu.pipeline_mode<synchronous>, transform_indices = @transform_0, window_bounds = array<i64: 64, 128>}, {pipeline_mode = #tpu.pipeline_mode<synchronous>, transform_indices = @transform_1, window_bounds = array<i64: 128, 384>}, {pipeline_mode = #tpu.pipeline_mode<synchronous>, transform_indices = @transform_2, window_bounds = array<i64: 1, 384>}, {pipeline_mode = #tpu.pipeline_mode<synchronous>, transform_indices = @transform_3, window_bounds = array<i64: 128, 384>}, {pipeline_mode = #tpu.pipeline_mode<synchronous>, transform_indices = @transform_4, window_bounds = array<i64: 1, 128>}, {pipeline_mode = #tpu.pipeline_mode<synchronous>, transform_indices = @transform_5, window_bounds = array<i64: 8, 128>}]} {
    %c0 = arith.constant 0 : index
    %c0_0 = arith.constant 0 : index
    %0 = vector.load %arg1[%c0, %c0_0] : memref<64x128xbf16, #tpu.memory_space<vmem>>, vector<64x128xbf16>
    %c0_1 = arith.constant 0 : index
    %c0_2 = arith.constant 0 : index
    %1 = vector.load %arg2[%c0_1, %c0_2] : memref<128x384xbf16, #tpu.memory_space<vmem>>, vector<128x384xbf16>
    %cst = arith.constant dense<0.000000e+00> : vector<64x384xf32>
    %2 = tpu.matmul %0, %1, %cst {dimension_numbers = #tpu.dot_dimension_numbers<[1], [0], [0], [1], [0, 0, 1, 1], [], []>} : vector<64x128xbf16>, vector<128x384xbf16>, vector<64x384xf32> -> vector<64x384xf32>
    %c0_3 = arith.constant 0 : index
    %c0_4 = arith.constant 0 : index
    %3 = vector.load %arg3[%c0_3, %c0_4] : memref<1x384xf32, #tpu.memory_space<vmem>>, vector<1x384xf32>
    %4 = vector.broadcast %3 : vector<1x384xf32> to vector<64x384xf32>
    %5 = arith.addf %2, %4 : vector<64x384xf32>
    %c0_5 = arith.constant 0 : index
    %c0_6 = arith.constant 0 : index
    %6 = vector.load %arg7[%c0_5, %c0_6] : memref<64x384xf32, #tpu.memory_space<vmem>>, vector<64x384xf32>
    tpu.vector_store %arg7[%c0_5, %c0_6], %5 {strides = array<i32>} : memref<64x384xf32, #tpu.memory_space<vmem>>, vector<64x384xf32>,
    %c0_7 = arith.constant 0 : index
    %c0_8 = arith.constant 0 : index
    %7 = vector.load %arg5[%c0_7, %c0_8] : memref<1x128xf32, #tpu.memory_space<vmem>>, vector<1x128xf32>
    %cst_9 = arith.constant 0.000000e+00 : f32
    %8 = vector.broadcast %cst_9 : f32 to vector<8x128xf32>
    %c0_i32 = arith.constant 0 : i32
    %c8_i32 = arith.constant 8 : i32
    %9 = arith.muli %c0_i32, %c8_i32 : i32
    %10 = tpu.assume_multiple %9, 8 : i32
    %11 = arith.index_cast %10 : i32 to index
    %c0_10 = arith.constant 0 : index
    %12 = vector.load %arg7[%11, %c0_10] : memref<64x384xf32, #tpu.memory_space<vmem>>, vector<8x384xf32>
    %13 = arith.truncf %8 : vector<8x128xf32> to vector<8x128xbf16>
    %c0_11 = arith.constant 0 : index
    %c0_12 = arith.constant 0 : index
    %14 = vector.load %arg4[%c0_11, %c0_12] : memref<128x384xbf16, #tpu.memory_space<vmem>>, vector<128x384xbf16>
    %cst_13 = arith.constant dense<0.000000e+00> : vector<8x384xf32>
    %15 = tpu.matmul %13, %14, %cst_13 {dimension_numbers = #tpu.dot_dimension_numbers<[1], [0], [0], [1], [0, 0, 1, 1], [], []>} : vector<8x128xbf16>, vector<128x384xbf16>, vector<8x384xf32> -> vector<8x384xf32>
    %16 = vector.extract_strided_slice %12 {offsets = [0, 0], sizes = [8, 128], strides = [1, 1]} : vector<8x384xf32> to vector<8x128xf32>
    %17 = vector.extract_strided_slice %15 {offsets = [0, 0], sizes = [8, 128], strides = [1, 1]} : vector<8x384xf32> to vector<8x128xf32>
    %18 = arith.addf %16, %17 : vector<8x128xf32>
    %19 = arith.negf %18 : vector<8x128xf32>
    %20 = math.exp %19 : vector<8x128xf32>
    %cst_14 = arith.constant 1.000000e+00 : f32
    %21 = vector.broadcast %cst_14 : f32 to vector<8x128xf32>
    %22 = arith.addf %21, %20 : vector<8x128xf32>
    %23 = arith.divf %21, %22 : vector<8x128xf32>
    %24 = vector.extract_strided_slice %12 {offsets = [0, 128], sizes = [8, 128], strides = [1, 1]} : vector<8x384xf32> to vector<8x128xf32>
    %25 = vector.extract_strided_slice %15 {offsets = [0, 128], sizes = [8, 128], strides = [1, 1]} : vector<8x384xf32> to vector<8x128xf32>
    %26 = arith.addf %24, %25 : vector<8x128xf32>
    %27 = arith.negf %26 : vector<8x128xf32>
    %28 = math.exp %27 : vector<8x128xf32>
    %cst_15 = arith.constant 1.000000e+00 : f32
    %29 = vector.broadcast %cst_15 : f32 to vector<8x128xf32>
    %30 = arith.addf %29, %28 : vector<8x128xf32>
    %31 = arith.divf %29, %30 : vector<8x128xf32>
    %32 = vector.extract_strided_slice %12 {offsets = [0, 256], sizes = [8, 128], strides = [1, 1]} : vector<8x384xf32> to vector<8x128xf32>
    %33 = vector.extract_strided_slice %15 {offsets = [0, 256], sizes = [8, 128], strides = [1, 1]} : vector<8x384xf32> to vector<8x128xf32>
    %34 = vector.broadcast %7 : vector<1x128xf32> to vector<8x128xf32>
    %35 = arith.addf %33, %34 : vector<8x128xf32>
    %36 = arith.mulf %23, %35 : vector<8x128xf32>
    %37 = arith.addf %32, %36 : vector<8x128xf32>
    %38 = math.tanh %37 : vector<8x128xf32>
    %cst_16 = arith.constant 1.000000e+00 : f32
    %39 = vector.broadcast %cst_16 : f32 to vector<8x128xf32>
    %40 = arith.subf %39, %31 : vector<8x128xf32>
    %41 = arith.mulf %40, %38 : vector<8x128xf32>
    %42 = arith.mulf %31, %8 : vector<8x128xf32>
    %43 = arith.addf %41, %42 : vector<8x128xf32>
    %c1_i32 = arith.constant 1 : i32
    %c8_i32_17 = arith.constant 8 : i32
    %44 = arith.muli %c1_i32, %c8_i32_17 : i32
    %45 = tpu.assume_multiple %44, 8 : i32
    %46 = arith.index_cast %45 : i32 to index
    %c0_18 = arith.constant 0 : index
    %47 = vector.load %arg7[%46, %c0_18] : memref<64x384xf32, #tpu.memory_space<vmem>>, vector<8x384xf32>
    %48 = arith.truncf %43 : vector<8x128xf32> to vector<8x128xbf16>
    %c0_19 = arith.constant 0 : index
    %c0_20 = arith.constant 0 : index
    %49 = vector.load %arg4[%c0_19, %c0_20] : memref<128x384xbf16, #tpu.memory_space<vmem>>, vector<128x384xbf16>
    %cst_21 = arith.constant dense<0.000000e+00> : vector<8x384xf32>
    %50 = tpu.matmul %48, %49, %cst_21 {dimension_numbers = #tpu.dot_dimension_numbers<[1], [0], [0], [1], [0, 0, 1, 1], [], []>} : vector<8x128xbf16>, vector<128x384xbf16>, vector<8x384xf32> -> vector<8x384xf32>
    %51 = vector.extract_strided_slice %47 {offsets = [0, 0], sizes = [8, 128], strides = [1, 1]} : vector<8x384xf32> to vector<8x128xf32>
    %52 = vector.extract_strided_slice %50 {offsets = [0, 0], sizes = [8, 128], strides = [1, 1]} : vector<8x384xf32> to vector<8x128xf32>
    %53 = arith.addf %51, %52 : vector<8x128xf32>
    %54 = arith.negf %53 : vector<8x128xf32>
    %55 = math.exp %54 : vector<8x128xf32>
    %cst_22 = arith.constant 1.000000e+00 : f32
    %56 = vector.broadcast %cst_22 : f32 to vector<8x128xf32>
    %57 = arith.addf %56, %55 : vector<8x128xf32>
    %58 = arith.divf %56, %57 : vector<8x128xf32>
    %59 = vector.extract_strided_slice %47 {offsets = [0, 128], sizes = [8, 128], strides = [1, 1]} : vector<8x384xf32> to vector<8x128xf32>
    %60 = vector.extract_strided_slice %50 {offsets = [0, 128], sizes = [8, 128], strides = [1, 1]} : vector<8x384xf32> to vector<8x128xf32>
    %61 = arith.addf %59, %60 : vector<8x128xf32>
    %62 = arith.negf %61 : vector<8x128xf32>
    %63 = math.exp %62 : vector<8x128xf32>
    %cst_23 = arith.constant 1.000000e+00 : f32
    %64 = vector.broadcast %cst_23 : f32 to vector<8x128xf32>
    %65 = arith.addf %64, %63 : vector<8x128xf32>
    %66 = arith.divf %64, %65 : vector<8x128xf32>
    %67 = vector.extract_strided_slice %47 {offsets = [0, 256], sizes = [8, 128], strides = [1, 1]} : vector<8x384xf32> to vector<8x128xf32>
    %68 = vector.extract_strided_slice %50 {offsets = [0, 256], sizes = [8, 128], strides = [1, 1]} : vector<8x384xf32> to vector<8x128xf32>
    %69 = vector.broadcast %7 : vector<1x128xf32> to vector<8x128xf32>
    %70 = arith.addf %68, %69 : vector<8x128xf32>
    %71 = arith.mulf %58, %70 : vector<8x128xf32>
    %72 = arith.addf %67, %71 : vector<8x128xf32>
    %73 = math.tanh %72 : vector<8x128xf32>
    %cst_24 = arith.constant 1.000000e+00 : f32
    %74 = vector.broadcast %cst_24 : f32 to vector<8x128xf32>
    %75 = arith.subf %74, %66 : vector<8x128xf32>
    %76 = arith.mulf %75, %73 : vector<8x128xf32>
    %77 = arith.mulf %66, %43 : vector<8x128xf32>
    %78 = arith.addf %76, %77 : vector<8x128xf32>
    %c2_i32 = arith.constant 2 : i32
    %c8_i32_25 = arith.constant 8 : i32
    %79 = arith.muli %c2_i32, %c8_i32_25 : i32
    %80 = tpu.assume_multiple %79, 8 : i32
    %81 = arith.index_cast %80 : i32 to index
    %c0_26 = arith.constant 0 : index
    %82 = vector.load %arg7[%81, %c0_26] : memref<64x384xf32, #tpu.memory_space<vmem>>, vector<8x384xf32>
    %83 = arith.truncf %78 : vector<8x128xf32> to vector<8x128xbf16>
    %c0_27 = arith.constant 0 : index
    %c0_28 = arith.constant 0 : index
    %84 = vector.load %arg4[%c0_27, %c0_28] : memref<128x384xbf16, #tpu.memory_space<vmem>>, vector<128x384xbf16>
    %cst_29 = arith.constant dense<0.000000e+00> : vector<8x384xf32>
    %85 = tpu.matmul %83, %84, %cst_29 {dimension_numbers = #tpu.dot_dimension_numbers<[1], [0], [0], [1], [0, 0, 1, 1], [], []>} : vector<8x128xbf16>, vector<128x384xbf16>, vector<8x384xf32> -> vector<8x384xf32>
    %86 = vector.extract_strided_slice %82 {offsets = [0, 0], sizes = [8, 128], strides = [1, 1]} : vector<8x384xf32> to vector<8x128xf32>
    %87 = vector.extract_strided_slice %85 {offsets = [0, 0], sizes = [8, 128], strides = [1, 1]} : vector<8x384xf32> to vector<8x128xf32>
    %88 = arith.addf %86, %87 : vector<8x128xf32>
    %89 = arith.negf %88 : vector<8x128xf32>
    %90 = math.exp %89 : vector<8x128xf32>
    %cst_30 = arith.constant 1.000000e+00 : f32
    %91 = vector.broadcast %cst_30 : f32 to vector<8x128xf32>
    %92 = arith.addf %91, %90 : vector<8x128xf32>
    %93 = arith.divf %91, %92 : vector<8x128xf32>
    %94 = vector.extract_strided_slice %82 {offsets = [0, 128], sizes = [8, 128], strides = [1, 1]} : vector<8x384xf32> to vector<8x128xf32>
    %95 = vector.extract_strided_slice %85 {offsets = [0, 128], sizes = [8, 128], strides = [1, 1]} : vector<8x384xf32> to vector<8x128xf32>
    %96 = arith.addf %94, %95 : vector<8x128xf32>
    %97 = arith.negf %96 : vector<8x128xf32>
    %98 = math.exp %97 : vector<8x128xf32>
    %cst_31 = arith.constant 1.000000e+00 : f32
    %99 = vector.broadcast %cst_31 : f32 to vector<8x128xf32>
    %100 = arith.addf %99, %98 : vector<8x128xf32>
    %101 = arith.divf %99, %100 : vector<8x128xf32>
    %102 = vector.extract_strided_slice %82 {offsets = [0, 256], sizes = [8, 128], strides = [1, 1]} : vector<8x384xf32> to vector<8x128xf32>
    %103 = vector.extract_strided_slice %85 {offsets = [0, 256], sizes = [8, 128], strides = [1, 1]} : vector<8x384xf32> to vector<8x128xf32>
    %104 = vector.broadcast %7 : vector<1x128xf32> to vector<8x128xf32>
    %105 = arith.addf %103, %104 : vector<8x128xf32>
    %106 = arith.mulf %93, %105 : vector<8x128xf32>
    %107 = arith.addf %102, %106 : vector<8x128xf32>
    %108 = math.tanh %107 : vector<8x128xf32>
    %cst_32 = arith.constant 1.000000e+00 : f32
    %109 = vector.broadcast %cst_32 : f32 to vector<8x128xf32>
    %110 = arith.subf %109, %101 : vector<8x128xf32>
    %111 = arith.mulf %110, %108 : vector<8x128xf32>
    %112 = arith.mulf %101, %78 : vector<8x128xf32>
    %113 = arith.addf %111, %112 : vector<8x128xf32>
    %c3_i32 = arith.constant 3 : i32
    %c8_i32_33 = arith.constant 8 : i32
    %114 = arith.muli %c3_i32, %c8_i32_33 : i32
    %115 = tpu.assume_multiple %114, 8 : i32
    %116 = arith.index_cast %115 : i32 to index
    %c0_34 = arith.constant 0 : index
    %117 = vector.load %arg7[%116, %c0_34] : memref<64x384xf32, #tpu.memory_space<vmem>>, vector<8x384xf32>
    %118 = arith.truncf %113 : vector<8x128xf32> to vector<8x128xbf16>
    %c0_35 = arith.constant 0 : index
    %c0_36 = arith.constant 0 : index
    %119 = vector.load %arg4[%c0_35, %c0_36] : memref<128x384xbf16, #tpu.memory_space<vmem>>, vector<128x384xbf16>
    %cst_37 = arith.constant dense<0.000000e+00> : vector<8x384xf32>
    %120 = tpu.matmul %118, %119, %cst_37 {dimension_numbers = #tpu.dot_dimension_numbers<[1], [0], [0], [1], [0, 0, 1, 1], [], []>} : vector<8x128xbf16>, vector<128x384xbf16>, vector<8x384xf32> -> vector<8x384xf32>
    %121 = vector.extract_strided_slice %117 {offsets = [0, 0], sizes = [8, 128], strides = [1, 1]} : vector<8x384xf32> to vector<8x128xf32>
    %122 = vector.extract_strided_slice %120 {offsets = [0, 0], sizes = [8, 128], strides = [1, 1]} : vector<8x384xf32> to vector<8x128xf32>
    %123 = arith.addf %121, %122 : vector<8x128xf32>
    %124 = arith.negf %123 : vector<8x128xf32>
    %125 = math.exp %124 : vector<8x128xf32>
    %cst_38 = arith.constant 1.000000e+00 : f32
    %126 = vector.broadcast %cst_38 : f32 to vector<8x128xf32>
    %127 = arith.addf %126, %125 : vector<8x128xf32>
    %128 = arith.divf %126, %127 : vector<8x128xf32>
    %129 = vector.extract_strided_slice %117 {offsets = [0, 128], sizes = [8, 128], strides = [1, 1]} : vector<8x384xf32> to vector<8x128xf32>
    %130 = vector.extract_strided_slice %120 {offsets = [0, 128], sizes = [8, 128], strides = [1, 1]} : vector<8x384xf32> to vector<8x128xf32>
    %131 = arith.addf %129, %130 : vector<8x128xf32>
    %132 = arith.negf %131 : vector<8x128xf32>
    %133 = math.exp %132 : vector<8x128xf32>
    %cst_39 = arith.constant 1.000000e+00 : f32
    %134 = vector.broadcast %cst_39 : f32 to vector<8x128xf32>
    %135 = arith.addf %134, %133 : vector<8x128xf32>
    %136 = arith.divf %134, %135 : vector<8x128xf32>
    %137 = vector.extract_strided_slice %117 {offsets = [0, 256], sizes = [8, 128], strides = [1, 1]} : vector<8x384xf32> to vector<8x128xf32>
    %138 = vector.extract_strided_slice %120 {offsets = [0, 256], sizes = [8, 128], strides = [1, 1]} : vector<8x384xf32> to vector<8x128xf32>
    %139 = vector.broadcast %7 : vector<1x128xf32> to vector<8x128xf32>
    %140 = arith.addf %138, %139 : vector<8x128xf32>
    %141 = arith.mulf %128, %140 : vector<8x128xf32>
    %142 = arith.addf %137, %141 : vector<8x128xf32>
    %143 = math.tanh %142 : vector<8x128xf32>
    %cst_40 = arith.constant 1.000000e+00 : f32
    %144 = vector.broadcast %cst_40 : f32 to vector<8x128xf32>
    %145 = arith.subf %144, %136 : vector<8x128xf32>
    %146 = arith.mulf %145, %143 : vector<8x128xf32>
    %147 = arith.mulf %136, %113 : vector<8x128xf32>
    %148 = arith.addf %146, %147 : vector<8x128xf32>
    %c4_i32 = arith.constant 4 : i32
    %c8_i32_41 = arith.constant 8 : i32
    %149 = arith.muli %c4_i32, %c8_i32_41 : i32
    %150 = tpu.assume_multiple %149, 8 : i32
    %151 = arith.index_cast %150 : i32 to index
    %c0_42 = arith.constant 0 : index
    %152 = vector.load %arg7[%151, %c0_42] : memref<64x384xf32, #tpu.memory_space<vmem>>, vector<8x384xf32>
    %153 = arith.truncf %148 : vector<8x128xf32> to vector<8x128xbf16>
    %c0_43 = arith.constant 0 : index
    %c0_44 = arith.constant 0 : index
    %154 = vector.load %arg4[%c0_43, %c0_44] : memref<128x384xbf16, #tpu.memory_space<vmem>>, vector<128x384xbf16>
    %cst_45 = arith.constant dense<0.000000e+00> : vector<8x384xf32>
    %155 = tpu.matmul %153, %154, %cst_45 {dimension_numbers = #tpu.dot_dimension_numbers<[1], [0], [0], [1], [0, 0, 1, 1], [], []>} : vector<8x128xbf16>, vector<128x384xbf16>, vector<8x384xf32> -> vector<8x384xf32>
    %156 = vector.extract_strided_slice %152 {offsets = [0, 0], sizes = [8, 128], strides = [1, 1]} : vector<8x384xf32> to vector<8x128xf32>
    %157 = vector.extract_strided_slice %155 {offsets = [0, 0], sizes = [8, 128], strides = [1, 1]} : vector<8x384xf32> to vector<8x128xf32>
    %158 = arith.addf %156, %157 : vector<8x128xf32>
    %159 = arith.negf %158 : vector<8x128xf32>
    %160 = math.exp %159 : vector<8x128xf32>
    %cst_46 = arith.constant 1.000000e+00 : f32
    %161 = vector.broadcast %cst_46 : f32 to vector<8x128xf32>
    %162 = arith.addf %161, %160 : vector<8x128xf32>
    %163 = arith.divf %161, %162 : vector<8x128xf32>
    %164 = vector.extract_strided_slice %152 {offsets = [0, 128], sizes = [8, 128], strides = [1, 1]} : vector<8x384xf32> to vector<8x128xf32>
    %165 = vector.extract_strided_slice %155 {offsets = [0, 128], sizes = [8, 128], strides = [1, 1]} : vector<8x384xf32> to vector<8x128xf32>
    %166 = arith.addf %164, %165 : vector<8x128xf32>
    %167 = arith.negf %166 : vector<8x128xf32>
    %168 = math.exp %167 : vector<8x128xf32>
    %cst_47 = arith.constant 1.000000e+00 : f32
    %169 = vector.broadcast %cst_47 : f32 to vector<8x128xf32>
    %170 = arith.addf %169, %168 : vector<8x128xf32>
    %171 = arith.divf %169, %170 : vector<8x128xf32>
    %172 = vector.extract_strided_slice %152 {offsets = [0, 256], sizes = [8, 128], strides = [1, 1]} : vector<8x384xf32> to vector<8x128xf32>
    %173 = vector.extract_strided_slice %155 {offsets = [0, 256], sizes = [8, 128], strides = [1, 1]} : vector<8x384xf32> to vector<8x128xf32>
    %174 = vector.broadcast %7 : vector<1x128xf32> to vector<8x128xf32>
    %175 = arith.addf %173, %174 : vector<8x128xf32>
    %176 = arith.mulf %163, %175 : vector<8x128xf32>
    %177 = arith.addf %172, %176 : vector<8x128xf32>
    %178 = math.tanh %177 : vector<8x128xf32>
    %cst_48 = arith.constant 1.000000e+00 : f32
    %179 = vector.broadcast %cst_48 : f32 to vector<8x128xf32>
    %180 = arith.subf %179, %171 : vector<8x128xf32>
    %181 = arith.mulf %180, %178 : vector<8x128xf32>
    %182 = arith.mulf %171, %148 : vector<8x128xf32>
    %183 = arith.addf %181, %182 : vector<8x128xf32>
    %c5_i32 = arith.constant 5 : i32
    %c8_i32_49 = arith.constant 8 : i32
    %184 = arith.muli %c5_i32, %c8_i32_49 : i32
    %185 = tpu.assume_multiple %184, 8 : i32
    %186 = arith.index_cast %185 : i32 to index
    %c0_50 = arith.constant 0 : index
    %187 = vector.load %arg7[%186, %c0_50] : memref<64x384xf32, #tpu.memory_space<vmem>>, vector<8x384xf32>
    %188 = arith.truncf %183 : vector<8x128xf32> to vector<8x128xbf16>
    %c0_51 = arith.constant 0 : index
    %c0_52 = arith.constant 0 : index
    %189 = vector.load %arg4[%c0_51, %c0_52] : memref<128x384xbf16, #tpu.memory_space<vmem>>, vector<128x384xbf16>
    %cst_53 = arith.constant dense<0.000000e+00> : vector<8x384xf32>
    %190 = tpu.matmul %188, %189, %cst_53 {dimension_numbers = #tpu.dot_dimension_numbers<[1], [0], [0], [1], [0, 0, 1, 1], [], []>} : vector<8x128xbf16>, vector<128x384xbf16>, vector<8x384xf32> -> vector<8x384xf32>
    %191 = vector.extract_strided_slice %187 {offsets = [0, 0], sizes = [8, 128], strides = [1, 1]} : vector<8x384xf32> to vector<8x128xf32>
    %192 = vector.extract_strided_slice %190 {offsets = [0, 0], sizes = [8, 128], strides = [1, 1]} : vector<8x384xf32> to vector<8x128xf32>
    %193 = arith.addf %191, %192 : vector<8x128xf32>
    %194 = arith.negf %193 : vector<8x128xf32>
    %195 = math.exp %194 : vector<8x128xf32>
    %cst_54 = arith.constant 1.000000e+00 : f32
    %196 = vector.broadcast %cst_54 : f32 to vector<8x128xf32>
    %197 = arith.addf %196, %195 : vector<8x128xf32>
    %198 = arith.divf %196, %197 : vector<8x128xf32>
    %199 = vector.extract_strided_slice %187 {offsets = [0, 128], sizes = [8, 128], strides = [1, 1]} : vector<8x384xf32> to vector<8x128xf32>
    %200 = vector.extract_strided_slice %190 {offsets = [0, 128], sizes = [8, 128], strides = [1, 1]} : vector<8x384xf32> to vector<8x128xf32>
    %201 = arith.addf %199, %200 : vector<8x128xf32>
    %202 = arith.negf %201 : vector<8x128xf32>
    %203 = math.exp %202 : vector<8x128xf32>
    %cst_55 = arith.constant 1.000000e+00 : f32
    %204 = vector.broadcast %cst_55 : f32 to vector<8x128xf32>
    %205 = arith.addf %204, %203 : vector<8x128xf32>
    %206 = arith.divf %204, %205 : vector<8x128xf32>
    %207 = vector.extract_strided_slice %187 {offsets = [0, 256], sizes = [8, 128], strides = [1, 1]} : vector<8x384xf32> to vector<8x128xf32>
    %208 = vector.extract_strided_slice %190 {offsets = [0, 256], sizes = [8, 128], strides = [1, 1]} : vector<8x384xf32> to vector<8x128xf32>
    %209 = vector.broadcast %7 : vector<1x128xf32> to vector<8x128xf32>
    %210 = arith.addf %208, %209 : vector<8x128xf32>
    %211 = arith.mulf %198, %210 : vector<8x128xf32>
    %212 = arith.addf %207, %211 : vector<8x128xf32>
    %213 = math.tanh %212 : vector<8x128xf32>
    %cst_56 = arith.constant 1.000000e+00 : f32
    %214 = vector.broadcast %cst_56 : f32 to vector<8x128xf32>
    %215 = arith.subf %214, %206 : vector<8x128xf32>
    %216 = arith.mulf %215, %213 : vector<8x128xf32>
    %217 = arith.mulf %206, %183 : vector<8x128xf32>
    %218 = arith.addf %216, %217 : vector<8x128xf32>
    %c6_i32 = arith.constant 6 : i32
    %c8_i32_57 = arith.constant 8 : i32
    %219 = arith.muli %c6_i32, %c8_i32_57 : i32
    %220 = tpu.assume_multiple %219, 8 : i32
    %221 = arith.index_cast %220 : i32 to index
    %c0_58 = arith.constant 0 : index
    %222 = vector.load %arg7[%221, %c0_58] : memref<64x384xf32, #tpu.memory_space<vmem>>, vector<8x384xf32>
    %223 = arith.truncf %218 : vector<8x128xf32> to vector<8x128xbf16>
    %c0_59 = arith.constant 0 : index
    %c0_60 = arith.constant 0 : index
    %224 = vector.load %arg4[%c0_59, %c0_60] : memref<128x384xbf16, #tpu.memory_space<vmem>>, vector<128x384xbf16>
    %cst_61 = arith.constant dense<0.000000e+00> : vector<8x384xf32>
    %225 = tpu.matmul %223, %224, %cst_61 {dimension_numbers = #tpu.dot_dimension_numbers<[1], [0], [0], [1], [0, 0, 1, 1], [], []>} : vector<8x128xbf16>, vector<128x384xbf16>, vector<8x384xf32> -> vector<8x384xf32>
    %226 = vector.extract_strided_slice %222 {offsets = [0, 0], sizes = [8, 128], strides = [1, 1]} : vector<8x384xf32> to vector<8x128xf32>
    %227 = vector.extract_strided_slice %225 {offsets = [0, 0], sizes = [8, 128], strides = [1, 1]} : vector<8x384xf32> to vector<8x128xf32>
    %228 = arith.addf %226, %227 : vector<8x128xf32>
    %229 = arith.negf %228 : vector<8x128xf32>
    %230 = math.exp %229 : vector<8x128xf32>
    %cst_62 = arith.constant 1.000000e+00 : f32
    %231 = vector.broadcast %cst_62 : f32 to vector<8x128xf32>
    %232 = arith.addf %231, %230 : vector<8x128xf32>
    %233 = arith.divf %231, %232 : vector<8x128xf32>
    %234 = vector.extract_strided_slice %222 {offsets = [0, 128], sizes = [8, 128], strides = [1, 1]} : vector<8x384xf32> to vector<8x128xf32>
    %235 = vector.extract_strided_slice %225 {offsets = [0, 128], sizes = [8, 128], strides = [1, 1]} : vector<8x384xf32> to vector<8x128xf32>
    %236 = arith.addf %234, %235 : vector<8x128xf32>
    %237 = arith.negf %236 : vector<8x128xf32>
    %238 = math.exp %237 : vector<8x128xf32>
    %cst_63 = arith.constant 1.000000e+00 : f32
    %239 = vector.broadcast %cst_63 : f32 to vector<8x128xf32>
    %240 = arith.addf %239, %238 : vector<8x128xf32>
    %241 = arith.divf %239, %240 : vector<8x128xf32>
    %242 = vector.extract_strided_slice %222 {offsets = [0, 256], sizes = [8, 128], strides = [1, 1]} : vector<8x384xf32> to vector<8x128xf32>
    %243 = vector.extract_strided_slice %225 {offsets = [0, 256], sizes = [8, 128], strides = [1, 1]} : vector<8x384xf32> to vector<8x128xf32>
    %244 = vector.broadcast %7 : vector<1x128xf32> to vector<8x128xf32>
    %245 = arith.addf %243, %244 : vector<8x128xf32>
    %246 = arith.mulf %233, %245 : vector<8x128xf32>
    %247 = arith.addf %242, %246 : vector<8x128xf32>
    %248 = math.tanh %247 : vector<8x128xf32>
    %cst_64 = arith.constant 1.000000e+00 : f32
    %249 = vector.broadcast %cst_64 : f32 to vector<8x128xf32>
    %250 = arith.subf %249, %241 : vector<8x128xf32>
    %251 = arith.mulf %250, %248 : vector<8x128xf32>
    %252 = arith.mulf %241, %218 : vector<8x128xf32>
    %253 = arith.addf %251, %252 : vector<8x128xf32>
    %c7_i32 = arith.constant 7 : i32
    %c8_i32_65 = arith.constant 8 : i32
    %254 = arith.muli %c7_i32, %c8_i32_65 : i32
    %255 = tpu.assume_multiple %254, 8 : i32
    %256 = arith.index_cast %255 : i32 to index
    %c0_66 = arith.constant 0 : index
    %257 = vector.load %arg7[%256, %c0_66] : memref<64x384xf32, #tpu.memory_space<vmem>>, vector<8x384xf32>
    %258 = arith.truncf %253 : vector<8x128xf32> to vector<8x128xbf16>
    %c0_67 = arith.constant 0 : index
    %c0_68 = arith.constant 0 : index
    %259 = vector.load %arg4[%c0_67, %c0_68] : memref<128x384xbf16, #tpu.memory_space<vmem>>, vector<128x384xbf16>
    %cst_69 = arith.constant dense<0.000000e+00> : vector<8x384xf32>
    %260 = tpu.matmul %258, %259, %cst_69 {dimension_numbers = #tpu.dot_dimension_numbers<[1], [0], [0], [1], [0, 0, 1, 1], [], []>} : vector<8x128xbf16>, vector<128x384xbf16>, vector<8x384xf32> -> vector<8x384xf32>
    %261 = vector.extract_strided_slice %257 {offsets = [0, 0], sizes = [8, 128], strides = [1, 1]} : vector<8x384xf32> to vector<8x128xf32>
    %262 = vector.extract_strided_slice %260 {offsets = [0, 0], sizes = [8, 128], strides = [1, 1]} : vector<8x384xf32> to vector<8x128xf32>
    %263 = arith.addf %261, %262 : vector<8x128xf32>
    %264 = arith.negf %263 : vector<8x128xf32>
    %265 = math.exp %264 : vector<8x128xf32>
    %cst_70 = arith.constant 1.000000e+00 : f32
    %266 = vector.broadcast %cst_70 : f32 to vector<8x128xf32>
    %267 = arith.addf %266, %265 : vector<8x128xf32>
    %268 = arith.divf %266, %267 : vector<8x128xf32>
    %269 = vector.extract_strided_slice %257 {offsets = [0, 128], sizes = [8, 128], strides = [1, 1]} : vector<8x384xf32> to vector<8x128xf32>
    %270 = vector.extract_strided_slice %260 {offsets = [0, 128], sizes = [8, 128], strides = [1, 1]} : vector<8x384xf32> to vector<8x128xf32>
    %271 = arith.addf %269, %270 : vector<8x128xf32>
    %272 = arith.negf %271 : vector<8x128xf32>
    %273 = math.exp %272 : vector<8x128xf32>
    %cst_71 = arith.constant 1.000000e+00 : f32
    %274 = vector.broadcast %cst_71 : f32 to vector<8x128xf32>
    %275 = arith.addf %274, %273 : vector<8x128xf32>
    %276 = arith.divf %274, %275 : vector<8x128xf32>
    %277 = vector.extract_strided_slice %257 {offsets = [0, 256], sizes = [8, 128], strides = [1, 1]} : vector<8x384xf32> to vector<8x128xf32>
    %278 = vector.extract_strided_slice %260 {offsets = [0, 256], sizes = [8, 128], strides = [1, 1]} : vector<8x384xf32> to vector<8x128xf32>
    %279 = vector.broadcast %7 : vector<1x128xf32> to vector<8x128xf32>
    %280 = arith.addf %278, %279 : vector<8x128xf32>
    %281 = arith.mulf %268, %280 : vector<8x128xf32>
    %282 = arith.addf %277, %281 : vector<8x128xf32>
    %283 = math.tanh %282 : vector<8x128xf32>
    %cst_72 = arith.constant 1.000000e+00 : f32
    %284 = vector.broadcast %cst_72 : f32 to vector<8x128xf32>
    %285 = arith.subf %284, %276 : vector<8x128xf32>
    %286 = arith.mulf %285, %283 : vector<8x128xf32>
    %287 = arith.mulf %276, %253 : vector<8x128xf32>
    %288 = arith.addf %286, %287 : vector<8x128xf32>
    %c8_i32_73 = arith.constant 8 : i32
    %c0_74 = arith.constant 0 : index
    %c0_75 = arith.constant 0 : index
    %289 = vector.load %arg6[%c0_74, %c0_75] : memref<8x128xf32, #tpu.memory_space<vmem>>, vector<8x128xf32>
    tpu.vector_store %arg6[%c0_74, %c0_75], %288 {strides = array<i32>} : memref<8x128xf32, #tpu.memory_space<vmem>>, vector<8x128xf32>,
    return
  }
  func.func @transform_0(%arg0: i32) -> (i32, i32) {
    %c0_i32 = arith.constant 0 : i32
    %c0_i32_0 = arith.constant 0 : i32
    %c0_i32_1 = arith.constant 0 : i32
    return %c0_i32, %c0_i32_0 : i32, i32
  }
  func.func @transform_1(%arg0: i32) -> (i32, i32) {
    %c0_i32 = arith.constant 0 : i32
    %c0_i32_0 = arith.constant 0 : i32
    %c0_i32_1 = arith.constant 0 : i32
    return %c0_i32, %c0_i32_0 : i32, i32
  }
  func.func @transform_2(%arg0: i32) -> (i32, i32) {
    %c0_i32 = arith.constant 0 : i32
    %c0_i32_0 = arith.constant 0 : i32
    %c0_i32_1 = arith.constant 0 : i32
    return %c0_i32, %c0_i32_0 : i32, i32
  }
  func.func @transform_3(%arg0: i32) -> (i32, i32) {
    %c0_i32 = arith.constant 0 : i32
    %c0_i32_0 = arith.constant 0 : i32
    %c0_i32_1 = arith.constant 0 : i32
    return %c0_i32, %c0_i32_0 : i32, i32
  }
  func.func @transform_4(%arg0: i32) -> (i32, i32) {
    %c0_i32 = arith.constant 0 : i32
    %c0_i32_0 = arith.constant 0 : i32
    %c0_i32_1 = arith.constant 0 : i32
    return %c0_i32, %c0_i32_0 : i32, i32
  }
  func.func @transform_5(%arg0: i32) -> (i32, i32) {
    %c0_i32 = arith.constant 0 : i32
    %c0_i32_0 = arith.constant 0 : i32
    %c0_i32_1 = arith.constant 0 : i32
    return %c0_i32, %c0_i32_0 : i32, i32
  }
}

</mosaic_0001>

<llo_original>
// kernel: tpu_custom_call.1
$region0: #{tpu_custom_call.1}
  #allocation0 [shape = 'u32[]', space=smem, size = 0x4, offset = 0x4, fixed_abs, tag = 'smem constant byte address 0x4 - core index']
  #allocation1 [shape = 'u32[144,128]{1,0:T(1,128)}', space=vmem, size = 0x12000, scoped, tag = 'internal scratch']
  #allocation2 [shape = 'f32[64,384]{1,0:T(8,128)}', space=vmem, size = 0x18000, scoped, tag = 'scratch operand']
  %s0 = inlined_call_operand.hbm [shape: bf16[64,128], index: 0, kind: input, shape index: {}]
  %s1 = inlined_call_operand.hbm [shape: bf16[128,384], index: 1, kind: input, shape index: {}]
  %s2 = inlined_call_operand.vmem [shape: f32[1,384], index: 2, kind: input, shape index: {}]
  %s3 = inlined_call_operand.hbm [shape: bf16[128,384], index: 3, kind: input, shape index: {}]
  %s4 = inlined_call_operand.vmem [shape: f32[1,128], index: 4, kind: input, shape index: {}]
  %s5 = inlined_call_operand.hbm [shape: f32[8,128], index: 5, kind: output, shape index: {}]
  %s6 = sld [smem:[#allocation0]]
  $region42: #{tpu_custom_call.1} parent=0
    _
  %s8 = ssub.s32 1, %s6
  %s9 = scalar_select 0, %s8, %s6
  $region1: #{tpu_custom_call.1} parent=0
    #allocation3 [shape = 'u8[16384]{0}', space=vmem, size = 0x4000, scoped, tag = 'input window, operand 0, single buffered']
    #allocation4 [shape = 's32[1]{0}', space=sflag, size = 0x4, scoped, tag = 'scoped memory for tpu_custom_call.1']
    #allocation5 [shape = 's32[1]{0}', space=sflag, size = 0x4, scoped, tag = 'scoped memory for tpu_custom_call.1']
    #allocation6 [shape = 'u8[98304]{0}', space=vmem, size = 0x18000, scoped, tag = 'input window, operand 1, single buffered']
    #allocation7 [shape = 's32[1]{0}', space=sflag, size = 0x4, scoped, tag = 'scoped memory for tpu_custom_call.1']
    #allocation8 [shape = 'u8[98304]{0}', space=vmem, size = 0x18000, scoped, tag = 'input window, operand 3, single buffered']
    #allocation9 [shape = 'u8[4096]{0}', space=vmem, size = 0x1000, scoped, tag = 'output window, operand 0, single buffered']
    %10 = vsyncpa [#allocation4], 0
    %11 = vsyncpa [#allocation7], 0
    %12 = vsyncpa [#allocation5], 0
    // Predicated region
    $region2: #{tpu_custom_call.1} parent=1 // pred_check
      _
    $region3: #{tpu_custom_call.1} parent=1 // pred_check_branch
      %14 = sbr.rel (0) target = $region5
    $region4: #{tpu_custom_call.1} parent=1 // pred_region
      %s16 = ssub.s32 512, 512
      %17 = vsyncadd [#allocation4], %s16
      %s18 = sshll.u32 [#allocation3], 4
      %s19 = int_to_ptr.vmem [resolvable:$true] %s18
      %24 = dma.hbm_to_vmem [thread:$0]  %s0, 512, %s19, [#allocation4], 64, 64, 4
    $region5: #{tpu_custom_call.1} parent=1 // pred_fallthru
      _
    // Predicated region
    $region6: #{tpu_custom_call.1} parent=1 // pred_check
      _
    $region7: #{tpu_custom_call.1} parent=1 // pred_check_branch
      %26 = sbr.rel (0) target = $region9
    $region8: #{tpu_custom_call.1} parent=1 // pred_region
      %s28 = ssub.s32 3072, 3072
      %29 = vsyncadd [#allocation7], %s28
      %s30 = sshll.u32 [#allocation6], 4
      %s31 = int_to_ptr.vmem [resolvable:$true] %s30
      %36 = dma.hbm_to_vmem [thread:$0]  %s1, 3072, %s31, [#allocation7], 192, 192, 12
    $region9: #{tpu_custom_call.1} parent=1 // pred_fallthru
      _
    // Predicated region
    $region10: #{tpu_custom_call.1} parent=1 // pred_check
      _
    $region11: #{tpu_custom_call.1} parent=1 // pred_check_branch
      %38 = sbr.rel (0) target = $region13
    $region12: #{tpu_custom_call.1} parent=1 // pred_region
      _
    $region13: #{tpu_custom_call.1} parent=1 // pred_fallthru
      _
    // Predicated region
    $region14: #{tpu_custom_call.1} parent=1 // pred_check
      _
    $region15: #{tpu_custom_call.1} parent=1 // pred_check_branch
      %40 = sbr.rel (0) target = $region17
    $region16: #{tpu_custom_call.1} parent=1 // pred_region
      %s42 = ssub.s32 3072, 3072
      %43 = vsyncadd [#allocation7], %s42
      %s44 = sshll.u32 [#allocation8], 4
      %s45 = int_to_ptr.vmem [resolvable:$true] %s44
      %50 = dma.hbm_to_vmem [thread:$0]  %s3, 3072, %s45, [#allocation7], 192, 192, 12
    $region17: #{tpu_custom_call.1} parent=1 // pred_fallthru
      _
    // Predicated region
    $region18: #{tpu_custom_call.1} parent=1 // pred_check
      _
    $region19: #{tpu_custom_call.1} parent=1 // pred_check_branch
      %52 = sbr.rel (0) target = $region21
    $region20: #{tpu_custom_call.1} parent=1 // pred_region
      _
    $region21: #{tpu_custom_call.1} parent=1 // pred_fallthru
      _
    // Predicated region
    $region22: #{tpu_custom_call.1} parent=1 // pred_check
      _
    $region23: #{tpu_custom_call.1} parent=1 // pred_check_branch
      %54 = sbr.rel (0) target = $region25
    $region24: #{tpu_custom_call.1} parent=1 // pred_region
      %55 = dma.done [#allocation4], 512
    $region25: #{tpu_custom_call.1} parent=1 // pred_fallthru
      _
    // Predicated region
    $region26: #{tpu_custom_call.1} parent=1 // pred_check
      _
    $region27: #{tpu_custom_call.1} parent=1 // pred_check_branch
      %57 = sbr.rel (0) target = $region29
    $region28: #{tpu_custom_call.1} parent=1 // pred_region
      %58 = dma.done [#allocation7], 3072
    $region29: #{tpu_custom_call.1} parent=1 // pred_fallthru
      _
    // Predicated region
    $region30: #{tpu_custom_call.1} parent=1 // pred_check
      _
    $region31: #{tpu_custom_call.1} parent=1 // pred_check_branch
      %60 = sbr.rel (0) target = $region33
    $region32: #{tpu_custom_call.1} parent=1 // pred_region
      %61 = dma.done [#allocation7], 3072
    $region33: #{tpu_custom_call.1} parent=1 // pred_fallthru
      _
    %v63 = vld [vmem:[#allocation3] sm:$0xf]
    %v64 = vld [vmem:[#allocation3 + $0x4] sm:$0xf]
    %v65 = vld [vmem:[#allocation3 + $0x8] sm:$0xf]
    %v66 = vld [vmem:[#allocation3 + $0xc] sm:$0xf]
    %v67 = vld [vmem:[#allocation3 + $0x10] sm:$0xf]
    %v68 = vld [vmem:[#allocation3 + $0x14] sm:$0xf]
    %v69 = vld [vmem:[#allocation3 + $0x18] sm:$0xf]
    %v70 = vld [vmem:[#allocation3 + $0x1c] sm:$0xf]
    %v71 = vld [vmem:[#allocation6] sm:$0xff]
    %v72 = vld [vmem:[#allocation6 + $0x8] sm:$0xf]
    %v73 = vld [vmem:[#allocation6 + $0xc] sm:$0xff]
    %v74 = vld [vmem:[#allocation6 + $0x14] sm:$0xf]
    %v75 = vld [vmem:[#allocation6 + $0x18] sm:$0xff]
    %v76 = vld [vmem:[#allocation6 + $0x20] sm:$0xf]
    %v77 = vld [vmem:[#allocation6 + $0x24] sm:$0xff]
    %v78 = vld [vmem:[#allocation6 + $0x2c] sm:$0xf]
    %v79 = vld [vmem:[#allocation6 + $0x30] sm:$0xff]
    %v80 = vld [vmem:[#allocation6 + $0x38] sm:$0xf]
    %v81 = vld [vmem:[#allocation6 + $0x3c] sm:$0xff]
    %v82 = vld [vmem:[#allocation6 + $0x44] sm:$0xf]
    %v83 = vld [vmem:[#allocation6 + $0x48] sm:$0xff]
    %v84 = vld [vmem:[#allocation6 + $0x50] sm:$0xf]
    %v85 = vld [vmem:[#allocation6 + $0x54] sm:$0xff]
    %v86 = vld [vmem:[#allocation6 + $0x5c] sm:$0xf]
    %v87 = vld [vmem:[#allocation6 + $0x60] sm:$0xff]
    %v88 = vld [vmem:[#allocation6 + $0x68] sm:$0xf]
    %v89 = vld [vmem:[#allocation6 + $0x6c] sm:$0xff]
    %v90 = vld [vmem:[#allocation6 + $0x74] sm:$0xf]
    %v91 = vld [vmem:[#allocation6 + $0x78] sm:$0xff]
    %v92 = vld [vmem:[#allocation6 + $0x80] sm:$0xf]
    %v93 = vld [vmem:[#allocation6 + $0x84] sm:$0xff]
    %v94 = vld [vmem:[#allocation6 + $0x8c] sm:$0xf]
    %v95 = vld [vmem:[#allocation6 + $0x90] sm:$0xff]
    %v96 = vld [vmem:[#allocation6 + $0x98] sm:$0xf]
    %v97 = vld [vmem:[#allocation6 + $0x9c] sm:$0xff]
    %v98 = vld [vmem:[#allocation6 + $0xa4] sm:$0xf]
    %v99 = vld [vmem:[#allocation6 + $0xa8] sm:$0xff]
    %v100 = vld [vmem:[#allocation6 + $0xb0] sm:$0xf]
    %v101 = vld [vmem:[#allocation6 + $0xb4] sm:$0xff]
    %v102 = vld [vmem:[#allocation6 + $0xbc] sm:$0xf]
    %v103 = vld [vmem:[%s2] sm:$0x7]
    %v105 = vlaneseq
    %v106 = vshrl.u32 %v105, 7
    %v107 = vsub.s32 0, %v106
    %v108 = vrot.slane %v103, %v107
    %v109 = vlaneseq
    %v110 = vshrl.u32 %v109, 7
    %v111 = vsub.s32 1, %v110
    %v112 = vrot.slane %v103, %v111
    %v113 = vlaneseq
    %v114 = vshrl.u32 %v113, 7
    %v115 = vsub.s32 2, %v114
    %v116 = vrot.slane %v103, %v115
    %v128 = vunpack.c.l.b16 %v63
    %v129 = vunpack.c.l.b16 %v64
    %v130 = vunpack.c.l.b16 %v65
    %v131 = vunpack.c.l.b16 %v66
    %v132 = vunpack.c.l.b16 %v67
    %v133 = vunpack.c.l.b16 %v68
    %v134 = vunpack.c.l.b16 %v69
    %v135 = vunpack.c.l.b16 %v70
    %v136 = vpack.c.b16 %v129, %v128
    %v137 = vpack.c.b16 %v131, %v130
    %v138 = vpack.c.b16 %v133, %v132
    %v139 = vpack.c.b16 %v135, %v134
    %v176 = vunpack.c.l.b16 %v71
    %v177 = vunpack.c.h.b16 %v71
    %v178 = vunpack.c.l.b16 %v72
    %v179 = vunpack.c.l.b16 %v73
    %v180 = vunpack.c.h.b16 %v73
    %v181 = vunpack.c.l.b16 %v74
    %v182 = vunpack.c.l.b16 %v75
    %v183 = vunpack.c.h.b16 %v75
    %v184 = vunpack.c.l.b16 %v76
    %v185 = vunpack.c.l.b16 %v77
    %v186 = vunpack.c.h.b16 %v77
    %v187 = vunpack.c.l.b16 %v78
    %v188 = vunpack.c.l.b16 %v79
    %v189 = vunpack.c.h.b16 %v79
    %v190 = vunpack.c.l.b16 %v80
    %v191 = vunpack.c.l.b16 %v81
    %v192 = vunpack.c.h.b16 %v81
    %v193 = vunpack.c.l.b16 %v82
    %v194 = vunpack.c.l.b16 %v83
    %v195 = vunpack.c.h.b16 %v83
    %v196 = vunpack.c.l.b16 %v84
    %v197 = vunpack.c.l.b16 %v85
    %v198 = vunpack.c.h.b16 %v85
    %v199 = vunpack.c.l.b16 %v86
    %v200 = vunpack.c.l.b16 %v87
    %v201 = vunpack.c.h.b16 %v87
    %v202 = vunpack.c.l.b16 %v88
    %v203 = vunpack.c.l.b16 %v89
    %v204 = vunpack.c.h.b16 %v89
    %v205 = vunpack.c.l.b16 %v90
    %v206 = vunpack.c.l.b16 %v91
    %v207 = vunpack.c.h.b16 %v91
    %v208 = vunpack.c.l.b16 %v92
    %v209 = vunpack.c.l.b16 %v93
    %v210 = vunpack.c.h.b16 %v93
    %v211 = vunpack.c.l.b16 %v94
    %v212 = vunpack.c.l.b16 %v95
    %v213 = vunpack.c.h.b16 %v95
    %v214 = vunpack.c.l.b16 %v96
    %v215 = vunpack.c.l.b16 %v97
    %v216 = vunpack.c.h.b16 %v97
    %v217 = vunpack.c.l.b16 %v98
    %v218 = vunpack.c.l.b16 %v99
    %v219 = vunpack.c.h.b16 %v99
    %v220 = vunpack.c.l.b16 %v100
    %v221 = vunpack.c.l.b16 %v101
    %v222 = vunpack.c.h.b16 %v101
    %v223 = vunpack.c.l.b16 %v102
    %v224 = vpack.c.b16 %v179, %v176
    %v225 = vpack.c.b16 %v180, %v177
    %v226 = vpack.c.b16 %v181, %v178
    %v227 = vpack.c.b16 %v185, %v182
    %v228 = vpack.c.b16 %v186, %v183
    %v229 = vpack.c.b16 %v187, %v184
    %v230 = vpack.c.b16 %v191, %v188
    %v231 = vpack.c.b16 %v192, %v189
    %v232 = vpack.c.b16 %v193, %v190
    %v233 = vpack.c.b16 %v197, %v194
    %v234 = vpack.c.b16 %v198, %v195
    %v235 = vpack.c.b16 %v199, %v196
    %v236 = vpack.c.b16 %v203, %v200
    %v237 = vpack.c.b16 %v204, %v201
    %v238 = vpack.c.b16 %v205, %v202
    %v239 = vpack.c.b16 %v209, %v206
    %v240 = vpack.c.b16 %v210, %v207
    %v241 = vpack.c.b16 %v211, %v208
    %v242 = vpack.c.b16 %v215, %v212
    %v243 = vpack.c.b16 %v216, %v213
    %v244 = vpack.c.b16 %v217, %v214
    %v245 = vpack.c.b16 %v221, %v218
    %v246 = vpack.c.b16 %v222, %v219
    %v247 = vpack.c.b16 %v223, %v220
    %272 = vmatprep.subr.bf16.mxu0 %v246
    %273 = vmatpush1.bf16.msra.mxu0 %v245
    %274 = vmatprep.subr.bf16.mxu0 %v243
    %275 = vmatpush1.bf16.msra.mxu0 %v242
    %276 = vmatprep.subr.bf16.mxu0 %v240
    %277 = vmatpush1.bf16.msra.mxu0 %v239
    %278 = vmatprep.subr.bf16.mxu0 %v237
    %279 = vmatpush1.bf16.msra.mxu0 %v236
    %280 = vmatprep.subr.bf16.mxu0 %v234
    %281 = vmatpush1.bf16.msra.mxu0 %v233
    %282 = vmatprep.subr.bf16.mxu0 %v231
    %283 = vmatpush1.bf16.msra.mxu0 %v230
    %284 = vmatprep.subr.bf16.mxu0 %v228
    %285 = vmatpush1.bf16.msra.mxu0 %v227
    %286 = vmatprep.subr.bf16.mxu0 %v225
    %287 = vmatpush1.bf16.msra.mxu0 %v224
    %288 = vmatprep.subr.bf16.mxu0 0
    %289 = vmatpush2.bf16.msra.mxu0 0
    %290 = vmatprep.subr.bf16.mxu0 0
    %291 = vmatpush2.bf16.msra.mxu0 0
    %292 = vmatprep.subr.bf16.mxu0 0
    %293 = vmatpush2.bf16.msra.mxu0 0
    %294 = vmatprep.subr.bf16.mxu0 0
    %295 = vmatpush2.bf16.msra.mxu0 0
    %296 = vmatprep.subr.bf16.mxu0 0
    %297 = vmatpush2.bf16.msra.mxu0 0
    %298 = vmatprep.subr.bf16.mxu0 0
    %299 = vmatpush2.bf16.msra.mxu0 0
    %300 = vmatprep.subr.bf16.mxu0 0
    %301 = vmatpush2.bf16.msra.mxu0 0
    %302 = vmatprep.subr.bf16.mxu0 0
    %303 = vmatpush2.bf16.msra.mxu0 0
    %304 = vmatprep.mubr.bf16.mxu0 0
    %305 = vmatmul.mubr.bf16.gmra.mxu0 %v136
    %v306 = vpop.f32.mrf.mxu0
    %v307 = vadd.f32 %v108, %v306
    %v308 = vpop.f32.mrf.mxu0
    %v309 = vadd.f32 %v112, %v308
    %v310 = vpop.f32.mrf.mxu0
    %v311 = vadd.f32 %v108, %v310
    %v312 = vpop.f32.mrf.mxu0
    %v313 = vadd.f32 %v112, %v312
    %314 = vmatprep.mubr.bf16.mxu0 0
    %315 = vmatmul.mubr.bf16.gmra.mxu0 %v137
    %v316 = vpop.f32.mrf.mxu0
    %v317 = vadd.f32 %v108, %v316
    %v318 = vpop.f32.mrf.mxu0
    %v319 = vadd.f32 %v112, %v318
    %v320 = vpop.f32.mrf.mxu0
    %v321 = vadd.f32 %v108, %v320
    %v322 = vpop.f32.mrf.mxu0
    %v323 = vadd.f32 %v112, %v322
    %324 = vmatprep.mubr.bf16.mxu0 0
    %325 = vmatmul.mubr.bf16.gmra.mxu0 %v138
    %v326 = vpop.f32.mrf.mxu0
    %v327 = vadd.f32 %v108, %v326
    %v328 = vpop.f32.mrf.mxu0
    %v329 = vadd.f32 %v112, %v328
    %v330 = vpop.f32.mrf.mxu0
    %v331 = vadd.f32 %v108, %v330
    %v332 = vpop.f32.mrf.mxu0
    %v333 = vadd.f32 %v112, %v332
    %334 = vmatprep.mubr.bf16.mxu0 0
    %335 = vmatmul.mubr.bf16.gmra.mxu0 %v139
    %v336 = vpop.f32.mrf.mxu0
    %v337 = vadd.f32 %v108, %v336
    %v338 = vpop.f32.mrf.mxu0
    %v339 = vadd.f32 %v112, %v338
    %v340 = vpop.f32.mrf.mxu0
    %v341 = vadd.f32 %v108, %v340
    %v342 = vpop.f32.mrf.mxu0
    %v343 = vadd.f32 %v112, %v342
    %344 = vdwg.mxu0
    %345 = vmatprep.subr.bf16.mxu0 0
    %346 = vmatpush1.bf16.msra.mxu0 %v247
    %347 = vmatprep.subr.bf16.mxu0 0
    %348 = vmatpush1.bf16.msra.mxu0 %v244
    %349 = vmatprep.subr.bf16.mxu0 0
    %350 = vmatpush1.bf16.msra.mxu0 %v241
    %351 = vmatprep.subr.bf16.mxu0 0
    %352 = vmatpush1.bf16.msra.mxu0 %v238
    %353 = vmatprep.subr.bf16.mxu0 0
    %354 = vmatpush1.bf16.msra.mxu0 %v235
    %355 = vmatprep.subr.bf16.mxu0 0
    %356 = vmatpush1.bf16.msra.mxu0 %v232
    %357 = vmatprep.subr.bf16.mxu0 0
    %358 = vmatpush1.bf16.msra.mxu0 %v229
    %359 = vmatprep.subr.bf16.mxu0 0
    %360 = vmatpush1.bf16.msra.mxu0 %v226
    %361 = vmatprep.subr.bf16.mxu0 0
    %362 = vmatpush2.bf16.msra.mxu0 0
    %363 = vmatprep.subr.bf16.mxu0 0
    %364 = vmatpush2.bf16.msra.mxu0 0
    %365 = vmatprep.subr.bf16.mxu0 0
    %366 = vmatpush2.bf16.msra.mxu0 0
    %367 = vmatprep.subr.bf16.mxu0 0
    %368 = vmatpush2.bf16.msra.mxu0 0
    %369 = vmatprep.subr.bf16.mxu0 0
    %370 = vmatpush2.bf16.msra.mxu0 0
    %371 = vmatprep.subr.bf16.mxu0 0
    %372 = vmatpush2.bf16.msra.mxu0 0
    %373 = vmatprep.subr.bf16.mxu0 0
    %374 = vmatpush2.bf16.msra.mxu0 0
    %375 = vmatprep.subr.bf16.mxu0 0
    %376 = vmatpush2.bf16.msra.mxu0 0
    %377 = vmatprep.mubr.bf16.mxu0 0
    %378 = vmatmul.mubr.bf16.gmra.mxu0 %v136
    %v379 = vpop.f32.mrf.mxu0
    %v380 = vadd.f32 %v116, %v379
    %v381 = vpop.f32.mrf.mxu0
    %v382 = vpop.f32.mrf.mxu0
    %v383 = vadd.f32 %v116, %v382
    %v384 = vpop.f32.mrf.mxu0
    %385 = vmatprep.mubr.bf16.mxu0 0
    %386 = vmatmul.mubr.bf16.gmra.mxu0 %v137
    %v387 = vpop.f32.mrf.mxu0
    %v388 = vadd.f32 %v116, %v387
    %v389 = vpop.f32.mrf.mxu0
    %v390 = vpop.f32.mrf.mxu0
    %v391 = vadd.f32 %v116, %v390
    %v392 = vpop.f32.mrf.mxu0
    %393 = vmatprep.mubr.bf16.mxu0 0
    %394 = vmatmul.mubr.bf16.gmra.mxu0 %v138
    %v395 = vpop.f32.mrf.mxu0
    %v396 = vadd.f32 %v116, %v395
    %v397 = vpop.f32.mrf.mxu0
    %v398 = vpop.f32.mrf.mxu0
    %v399 = vadd.f32 %v116, %v398
    %v400 = vpop.f32.mrf.mxu0
    %401 = vmatprep.mubr.bf16.mxu0 0
    %402 = vmatmul.mubr.bf16.gmra.mxu0 %v139
    %v403 = vpop.f32.mrf.mxu0
    %v404 = vadd.f32 %v116, %v403
    %v405 = vpop.f32.mrf.mxu0
    %v406 = vpop.f32.mrf.mxu0
    %v407 = vadd.f32 %v116, %v406
    %v408 = vpop.f32.mrf.mxu0
    %409 = vdwg.mxu0
    %410 = vst [vmem:[#allocation2] sm:$0xff] %v307
    %411 = vst [vmem:[#allocation2 + $0x8] sm:$0xff] %v309
    %412 = vst [vmem:[#allocation2 + $0x10] sm:$0xff] %v380
    %413 = vst [vmem:[#allocation2 + $0x18] sm:$0xff] %v311
    %414 = vst [vmem:[#allocation2 + $0x20] sm:$0xff] %v313
    %415 = vst [vmem:[#allocation2 + $0x28] sm:$0xff] %v383
    %416 = vst [vmem:[#allocation2 + $0x30] sm:$0xff] %v317
    %417 = vst [vmem:[#allocation2 + $0x38] sm:$0xff] %v319
    %418 = vst [vmem:[#allocation2 + $0x40] sm:$0xff] %v388
    %419 = vst [vmem:[#allocation2 + $0x48] sm:$0xff] %v321
    %420 = vst [vmem:[#allocation2 + $0x50] sm:$0xff] %v323
    %421 = vst [vmem:[#allocation2 + $0x58] sm:$0xff] %v391
    %422 = vst [vmem:[#allocation2 + $0x60] sm:$0xff] %v327
    %423 = vst [vmem:[#allocation2 + $0x68] sm:$0xff] %v329
    %424 = vst [vmem:[#allocation2 + $0x70] sm:$0xff] %v396
    %425 = vst [vmem:[#allocation2 + $0x78] sm:$0xff] %v331
    %426 = vst [vmem:[#allocation2 + $0x80] sm:$0xff] %v333
    %427 = vst [vmem:[#allocation2 + $0x88] sm:$0xff] %v399
    %428 = vst [vmem:[#allocation2 + $0x90] sm:$0xff] %v337
    %429 = vst [vmem:[#allocation2 + $0x98] sm:$0xff] %v339
    %430 = vst [vmem:[#allocation2 + $0xa0] sm:$0xff] %v404
    %431 = vst [vmem:[#allocation2 + $0xa8] sm:$0xff] %v341
    %432 = vst [vmem:[#allocation2 + $0xb0] sm:$0xff] %v343
    %433 = vst [vmem:[#allocation2 + $0xb8] sm:$0xff] %v407
    %v434 = vld [vmem:[%s4] sm:$0x1]
    %s435 = smul.u32 0, 3
    %s436 = smul.addr %s435, 8
    %s437 = scalar_lea.vmem [#allocation2], %s436
    %v438 = vld [vmem:[%s437] sm:$0xff]
    %v439 = vld [vmem:[%s437 + $0x8] sm:$0xff]
    %v440 = vld [vmem:[%s437 + $0x10] sm:$0xff]
    %v441 = vld [vmem:[#allocation8] sm:$0xff]
    %v442 = vld [vmem:[#allocation8 + $0x8] sm:$0xf]
    %v443 = vld [vmem:[#allocation8 + $0xc] sm:$0xff]
    %v444 = vld [vmem:[#allocation8 + $0x14] sm:$0xf]
    %v445 = vld [vmem:[#allocation8 + $0x18] sm:$0xff]
    %v446 = vld [vmem:[#allocation8 + $0x20] sm:$0xf]
    %v447 = vld [vmem:[#allocation8 + $0x24] sm:$0xff]
    %v448 = vld [vmem:[#allocation8 + $0x2c] sm:$0xf]
    %v449 = vld [vmem:[#allocation8 + $0x30] sm:$0xff]
    %v450 = vld [vmem:[#allocation8 + $0x38] sm:$0xf]
    %v451 = vld [vmem:[#allocation8 + $0x3c] sm:$0xff]
    %v452 = vld [vmem:[#allocation8 + $0x44] sm:$0xf]
    %v453 = vld [vmem:[#allocation8 + $0x48] sm:$0xff]
    %v454 = vld [vmem:[#allocation8 + $0x50] sm:$0xf]
    %v455 = vld [vmem:[#allocation8 + $0x54] sm:$0xff]
    %v456 = vld [vmem:[#allocation8 + $0x5c] sm:$0xf]
    %v457 = vld [vmem:[#allocation8 + $0x60] sm:$0xff]
    %v458 = vld [vmem:[#allocation8 + $0x68] sm:$0xf]
    %v459 = vld [vmem:[#allocation8 + $0x6c] sm:$0xff]
    %v460 = vld [vmem:[#allocation8 + $0x74] sm:$0xf]
    %v461 = vld [vmem:[#allocation8 + $0x78] sm:$0xff]
    %v462 = vld [vmem:[#allocation8 + $0x80] sm:$0xf]
    %v463 = vld [vmem:[#allocation8 + $0x84] sm:$0xff]
    %v464 = vld [vmem:[#allocation8 + $0x8c] sm:$0xf]
    %v465 = vld [vmem:[#allocation8 + $0x90] sm:$0xff]
    %v466 = vld [vmem:[#allocation8 + $0x98] sm:$0xf]
    %v467 = vld [vmem:[#allocation8 + $0x9c] sm:$0xff]
    %v468 = vld [vmem:[#allocation8 + $0xa4] sm:$0xf]
    %v469 = vld [vmem:[#allocation8 + $0xa8] sm:$0xff]
    %v470 = vld [vmem:[#allocation8 + $0xb0] sm:$0xf]
    %v471 = vld [vmem:[#allocation8 + $0xb4] sm:$0xff]
    %v472 = vld [vmem:[#allocation8 + $0xbc] sm:$0xf]
    %v505 = vunpack.c.l.b16 %v441
    %v506 = vunpack.c.h.b16 %v441
    %v507 = vunpack.c.l.b16 %v442
    %v508 = vunpack.c.l.b16 %v443
    %v509 = vunpack.c.h.b16 %v443
    %v510 = vunpack.c.l.b16 %v444
    %v511 = vunpack.c.l.b16 %v445
    %v512 = vunpack.c.h.b16 %v445
    %v513 = vunpack.c.l.b16 %v446
    %v514 = vunpack.c.l.b16 %v447
    %v515 = vunpack.c.h.b16 %v447
    %v516 = vunpack.c.l.b16 %v448
    %v517 = vunpack.c.l.b16 %v449
    %v518 = vunpack.c.h.b16 %v449
    %v519 = vunpack.c.l.b16 %v450
    %v520 = vunpack.c.l.b16 %v451
    %v521 = vunpack.c.h.b16 %v451
    %v522 = vunpack.c.l.b16 %v452
    %v523 = vunpack.c.l.b16 %v453
    %v524 = vunpack.c.h.b16 %v453
    %v525 = vunpack.c.l.b16 %v454
    %v526 = vunpack.c.l.b16 %v455
    %v527 = vunpack.c.h.b16 %v455
    %v528 = vunpack.c.l.b16 %v456
    %v529 = vunpack.c.l.b16 %v457
    %v530 = vunpack.c.h.b16 %v457
    %v531 = vunpack.c.l.b16 %v458
    %v532 = vunpack.c.l.b16 %v459
    %v533 = vunpack.c.h.b16 %v459
    %v534 = vunpack.c.l.b16 %v460
    %v535 = vunpack.c.l.b16 %v461
    %v536 = vunpack.c.h.b16 %v461
    %v537 = vunpack.c.l.b16 %v462
    %v538 = vunpack.c.l.b16 %v463
    %v539 = vunpack.c.h.b16 %v463
    %v540 = vunpack.c.l.b16 %v464
    %v541 = vunpack.c.l.b16 %v465
    %v542 = vunpack.c.h.b16 %v465
    %v543 = vunpack.c.l.b16 %v466
    %v544 = vunpack.c.l.b16 %v467
    %v545 = vunpack.c.h.b16 %v467
    %v546 = vunpack.c.l.b16 %v468
    %v547 = vunpack.c.l.b16 %v469
    %v548 = vunpack.c.h.b16 %v469
    %v549 = vunpack.c.l.b16 %v470
    %v550 = vunpack.c.l.b16 %v471
    %v551 = vunpack.c.h.b16 %v471
    %v552 = vunpack.c.l.b16 %v472
    %v553 = vpack.c.b16 %v508, %v505
    %v554 = vpack.c.b16 %v509, %v506
    %v555 = vpack.c.b16 %v510, %v507
    %v556 = vpack.c.b16 %v514, %v511
    %v557 = vpack.c.b16 %v515, %v512
    %v558 = vpack.c.b16 %v516, %v513
    %v559 = vpack.c.b16 %v520, %v517
    %v560 = vpack.c.b16 %v521, %v518
    %v561 = vpack.c.b16 %v522, %v519
    %v562 = vpack.c.b16 %v526, %v523
    %v563 = vpack.c.b16 %v527, %v524
    %v564 = vpack.c.b16 %v528, %v525
    %v565 = vpack.c.b16 %v532, %v529
    %v566 = vpack.c.b16 %v533, %v530
    %v567 = vpack.c.b16 %v534, %v531
    %v568 = vpack.c.b16 %v538, %v535
    %v569 = vpack.c.b16 %v539, %v536
    %v570 = vpack.c.b16 %v540, %v537
    %v571 = vpack.c.b16 %v544, %v541
    %v572 = vpack.c.b16 %v545, %v542
    %v573 = vpack.c.b16 %v546, %v543
    %v574 = vpack.c.b16 %v550, %v547
    %v575 = vpack.c.b16 %v551, %v548
    %v576 = vpack.c.b16 %v552, %v549
    %601 = vmatprep.subr.bf16.mxu0 %v575
    %602 = vmatpush1.bf16.msra.mxu0 %v574
    %603 = vmatprep.subr.bf16.mxu0 %v572
    %604 = vmatpush1.bf16.msra.mxu0 %v571
    %605 = vmatprep.subr.bf16.mxu0 %v569
    %606 = vmatpush1.bf16.msra.mxu0 %v568
    %607 = vmatprep.subr.bf16.mxu0 %v566
    %608 = vmatpush1.bf16.msra.mxu0 %v565
    %609 = vmatprep.subr.bf16.mxu0 %v563
    %610 = vmatpush1.bf16.msra.mxu0 %v562
    %611 = vmatprep.subr.bf16.mxu0 %v560
    %612 = vmatpush1.bf16.msra.mxu0 %v559
    %613 = vmatprep.subr.bf16.mxu0 %v557
    %614 = vmatpush1.bf16.msra.mxu0 %v556
    %615 = vmatprep.subr.bf16.mxu0 %v554
    %616 = vmatpush1.bf16.msra.mxu0 %v553
    %617 = vmatprep.subr.bf16.mxu0 0
    %618 = vmatpush2.bf16.msra.mxu0 0
    %619 = vmatprep.subr.bf16.mxu0 0
    %620 = vmatpush2.bf16.msra.mxu0 0
    %621 = vmatprep.subr.bf16.mxu0 0
    %622 = vmatpush2.bf16.msra.mxu0 0
    %623 = vmatprep.subr.bf16.mxu0 0
    %624 = vmatpush2.bf16.msra.mxu0 0
    %625 = vmatprep.subr.bf16.mxu0 0
    %626 = vmatpush2.bf16.msra.mxu0 0
    %627 = vmatprep.subr.bf16.mxu0 0
    %628 = vmatpush2.bf16.msra.mxu0 0
    %629 = vmatprep.subr.bf16.mxu0 0
    %630 = vmatpush2.bf16.msra.mxu0 0
    %631 = vmatprep.subr.bf16.mxu0 0
    %632 = vmatpush2.bf16.msra.mxu0 0
    %633 = vmatprep.mubr.bf16.mxu0 0
    %634 = vmatmul.mubr.bf16.gmra.mxu0 0
    %v635 = vpop.f32.mrf.mxu0
    %v636 = vadd.f32 0.0, %v635
    %v637 = vpop.f32.mrf.mxu0
    %v638 = vadd.f32 0.0, %v637
    %v639 = vpop.f32.mrf.mxu0
    %v640 = vpop.f32.mrf.mxu0
    %641 = vdwg.mxu0
    %642 = vmatprep.subr.bf16.mxu0 0
    %643 = vmatpush1.bf16.msra.mxu0 %v576
    %644 = vmatprep.subr.bf16.mxu0 0
    %645 = vmatpush1.bf16.msra.mxu0 %v573
    %646 = vmatprep.subr.bf16.mxu0 0
    %647 = vmatpush1.bf16.msra.mxu0 %v570
    %648 = vmatprep.subr.bf16.mxu0 0
    %649 = vmatpush1.bf16.msra.mxu0 %v567
    %650 = vmatprep.subr.bf16.mxu0 0
    %651 = vmatpush1.bf16.msra.mxu0 %v564
    %652 = vmatprep.subr.bf16.mxu0 0
    %653 = vmatpush1.bf16.msra.mxu0 %v561
    %654 = vmatprep.subr.bf16.mxu0 0
    %655 = vmatpush1.bf16.msra.mxu0 %v558
    %656 = vmatprep.subr.bf16.mxu0 0
    %657 = vmatpush1.bf16.msra.mxu0 %v555
    %658 = vmatprep.subr.bf16.mxu0 0
    %659 = vmatpush2.bf16.msra.mxu0 0
    %660 = vmatprep.subr.bf16.mxu0 0
    %661 = vmatpush2.bf16.msra.mxu0 0
    %662 = vmatprep.subr.bf16.mxu0 0
    %663 = vmatpush2.bf16.msra.mxu0 0
    %664 = vmatprep.subr.bf16.mxu0 0
    %665 = vmatpush2.bf16.msra.mxu0 0
    %666 = vmatprep.subr.bf16.mxu0 0
    %667 = vmatpush2.bf16.msra.mxu0 0
    %668 = vmatprep.subr.bf16.mxu0 0
    %669 = vmatpush2.bf16.msra.mxu0 0
    %670 = vmatprep.subr.bf16.mxu0 0
    %671 = vmatpush2.bf16.msra.mxu0 0
    %672 = vmatprep.subr.bf16.mxu0 0
    %673 = vmatpush2.bf16.msra.mxu0 0
    %674 = vmatprep.mubr.bf16.mxu0 0
    %675 = vmatmul.mubr.bf16.gmra.mxu0 0
    %v676 = vpop.f32.mrf.mxu0
    %v677 = vadd.f32 0.0, %v676
    %v678 = vpop.f32.mrf.mxu0
    %v679 = vpop.f32.mrf.mxu0
    %v680 = vpop.f32.mrf.mxu0
    %681 = vdwg.mxu0
    %v682 = vadd.f32 %v438, %v636
    %v683 = vxor.u32 %v682, 2147483648
    %v684 = vmul.f32 %v683, 1.442695
    %v685 = vpow.pop %v684
    %v686 = vadd.f32 %v685, 1.0
    %v687 = vrcp.pop %v686
    %v688 = vmul.f32 1.0, %v687
    %v689 = vadd.f32 %v439, %v638
    %v690 = vxor.u32 %v689, 2147483648
    %v691 = vmul.f32 %v690, 1.442695
    %v692 = vpow.pop %v691
    %v693 = vadd.f32 %v692, 1.0
    %v694 = vrcp.pop %v693
    %v695 = vmul.f32 1.0, %v694
    %v697 = vlaneseq
    %v698 = vshrl.u32 %v697, 7
    %v699 = vsub.s32 0, %v698
    %v700 = vrot.slane %v434, %v699
    %v702 = vadd.f32 %v677, %v700
    %v703 = vmul.f32 %v688, %v702
    %v704 = vadd.f32 %v440, %v703
    %v705 = vtanh.pop %v704
    %v706 = vsub.f32 1.0, %v695
    %v707 = vmul.f32 %v706, %v705
    %v708 = vmul.f32 %v695, 0.0
    %v709 = vadd.f32 %v707, %v708
    %s710 = smul.u32 1, 3
    %s711 = smul.addr %s710, 8
    %s712 = scalar_lea.vmem [#allocation2], %s711
    %v713 = vld [vmem:[%s712] sm:$0xff]
    %v714 = vld [vmem:[%s712 + $0x8] sm:$0xff]
    %v715 = vld [vmem:[%s712 + $0x10] sm:$0xff]
    %v716 = vpack.c.bf16 %v709, %v709
    %717 = vmatprep.subr.bf16.mxu0 %v575
    %718 = vmatpush1.bf16.msra.mxu0 %v574
    %719 = vmatprep.subr.bf16.mxu0 %v572
    %720 = vmatpush1.bf16.msra.mxu0 %v571
    %721 = vmatprep.subr.bf16.mxu0 %v569
    %722 = vmatpush1.bf16.msra.mxu0 %v568
    %723 = vmatprep.subr.bf16.mxu0 %v566
    %724 = vmatpush1.bf16.msra.mxu0 %v565
    %725 = vmatprep.subr.bf16.mxu0 %v563
    %726 = vmatpush1.bf16.msra.mxu0 %v562
    %727 = vmatprep.subr.bf16.mxu0 %v560
    %728 = vmatpush1.bf16.msra.mxu0 %v559
    %729 = vmatprep.subr.bf16.mxu0 %v557
    %730 = vmatpush1.bf16.msra.mxu0 %v556
    %731 = vmatprep.subr.bf16.mxu0 %v554
    %732 = vmatpush1.bf16.msra.mxu0 %v553
    %733 = vmatprep.subr.bf16.mxu0 0
    %734 = vmatpush2.bf16.msra.mxu0 0
    %735 = vmatprep.subr.bf16.mxu0 0
    %736 = vmatpush2.bf16.msra.mxu0 0
    %737 = vmatprep.subr.bf16.mxu0 0
    %738 = vmatpush2.bf16.msra.mxu0 0
    %739 = vmatprep.subr.bf16.mxu0 0
    %740 = vmatpush2.bf16.msra.mxu0 0
    %741 = vmatprep.subr.bf16.mxu0 0
    %742 = vmatpush2.bf16.msra.mxu0 0
    %743 = vmatprep.subr.bf16.mxu0 0
    %744 = vmatpush2.bf16.msra.mxu0 0
    %745 = vmatprep.subr.bf16.mxu0 0
    %746 = vmatpush2.bf16.msra.mxu0 0
    %747 = vmatprep.subr.bf16.mxu0 0
    %748 = vmatpush2.bf16.msra.mxu0 0
    %749 = vmatprep.mubr.bf16.mxu0 0
    %750 = vmatmul.mubr.bf16.gmra.mxu0 %v716
    %v751 = vpop.f32.mrf.mxu0
    %v752 = vadd.f32 0.0, %v751
    %v753 = vpop.f32.mrf.mxu0
    %v754 = vadd.f32 0.0, %v753
    %v755 = vpop.f32.mrf.mxu0
    %v756 = vpop.f32.mrf.mxu0
    %757 = vdwg.mxu0
    %758 = vmatprep.subr.bf16.mxu0 0
    %759 = vmatpush1.bf16.msra.mxu0 %v576
    %760 = vmatprep.subr.bf16.mxu0 0
    %761 = vmatpush1.bf16.msra.mxu0 %v573
    %762 = vmatprep.subr.bf16.mxu0 0
    %763 = vmatpush1.bf16.msra.mxu0 %v570
    %764 = vmatprep.subr.bf16.mxu0 0
    %765 = vmatpush1.bf16.msra.mxu0 %v567
    %766 = vmatprep.subr.bf16.mxu0 0
    %767 = vmatpush1.bf16.msra.mxu0 %v564
    %768 = vmatprep.subr.bf16.mxu0 0
    %769 = vmatpush1.bf16.msra.mxu0 %v561
    %770 = vmatprep.subr.bf16.mxu0 0
    %771 = vmatpush1.bf16.msra.mxu0 %v558
    %772 = vmatprep.subr.bf16.mxu0 0
    %773 = vmatpush1.bf16.msra.mxu0 %v555
    %774 = vmatprep.subr.bf16.mxu0 0
    %775 = vmatpush2.bf16.msra.mxu0 0
    %776 = vmatprep.subr.bf16.mxu0 0
    %777 = vmatpush2.bf16.msra.mxu0 0
    %778 = vmatprep.subr.bf16.mxu0 0
    %779 = vmatpush2.bf16.msra.mxu0 0
    %780 = vmatprep.subr.bf16.mxu0 0
    %781 = vmatpush2.bf16.msra.mxu0 0
    %782 = vmatprep.subr.bf16.mxu0 0
    %783 = vmatpush2.bf16.msra.mxu0 0
    %784 = vmatprep.subr.bf16.mxu0 0
    %785 = vmatpush2.bf16.msra.mxu0 0
    %786 = vmatprep.subr.bf16.mxu0 0
    %787 = vmatpush2.bf16.msra.mxu0 0
    %788 = vmatprep.subr.bf16.mxu0 0
    %789 = vmatpush2.bf16.msra.mxu0 0
    %790 = vmatprep.mubr.bf16.mxu0 0
    %791 = vmatmul.mubr.bf16.gmra.mxu0 %v716
    %v792 = vpop.f32.mrf.mxu0
    %v793 = vadd.f32 0.0, %v792
    %v794 = vpop.f32.mrf.mxu0
    %v795 = vpop.f32.mrf.mxu0
    %v796 = vpop.f32.mrf.mxu0
    %797 = vdwg.mxu0
    %v798 = vadd.f32 %v713, %v752
    %v799 = vxor.u32 %v798, 2147483648
    %v800 = vmul.f32 %v799, 1.442695
    %v801 = vpow.pop %v800
    %v802 = vadd.f32 %v801, 1.0
    %v803 = vrcp.pop %v802
    %v804 = vmul.f32 1.0, %v803
    %v805 = vadd.f32 %v714, %v754
    %v806 = vxor.u32 %v805, 2147483648
    %v807 = vmul.f32 %v806, 1.442695
    %v808 = vpow.pop %v807
    %v809 = vadd.f32 %v808, 1.0
    %v810 = vrcp.pop %v809
    %v811 = vmul.f32 1.0, %v810
    %v812 = vadd.f32 %v793, %v700
    %v813 = vmul.f32 %v804, %v812
    %v814 = vadd.f32 %v715, %v813
    %v815 = vtanh.pop %v814
    %v816 = vsub.f32 1.0, %v811
    %v817 = vmul.f32 %v816, %v815
    %v818 = vmul.f32 %v811, %v709
    %v819 = vadd.f32 %v817, %v818
    %s820 = smul.u32 2, 3
    %s821 = smul.addr %s820, 8
    %s822 = scalar_lea.vmem [#allocation2], %s821
    %v823 = vld [vmem:[%s822] sm:$0xff]
    %v824 = vld [vmem:[%s822 + $0x8] sm:$0xff]
    %v825 = vld [vmem:[%s822 + $0x10] sm:$0xff]
    %v826 = vpack.c.bf16 %v819, %v819
    %827 = vmatprep.subr.bf16.mxu0 %v575
    %828 = vmatpush1.bf16.msra.mxu0 %v574
    %829 = vmatprep.subr.bf16.mxu0 %v572
    %830 = vmatpush1.bf16.msra.mxu0 %v571
    %831 = vmatprep.subr.bf16.mxu0 %v569
    %832 = vmatpush1.bf16.msra.mxu0 %v568
    %833 = vmatprep.subr.bf16.mxu0 %v566
    %834 = vmatpush1.bf16.msra.mxu0 %v565
    %835 = vmatprep.subr.bf16.mxu0 %v563
    %836 = vmatpush1.bf16.msra.mxu0 %v562
    %837 = vmatprep.subr.bf16.mxu0 %v560
    %838 = vmatpush1.bf16.msra.mxu0 %v559
    %839 = vmatprep.subr.bf16.mxu0 %v557
    %840 = vmatpush1.bf16.msra.mxu0 %v556
    %841 = vmatprep.subr.bf16.mxu0 %v554
    %842 = vmatpush1.bf16.msra.mxu0 %v553
    %843 = vmatprep.subr.bf16.mxu0 0
    %844 = vmatpush2.bf16.msra.mxu0 0
    %845 = vmatprep.subr.bf16.mxu0 0
    %846 = vmatpush2.bf16.msra.mxu0 0
    %847 = vmatprep.subr.bf16.mxu0 0
    %848 = vmatpush2.bf16.msra.mxu0 0
    %849 = vmatprep.subr.bf16.mxu0 0
    %850 = vmatpush2.bf16.msra.mxu0 0
    %851 = vmatprep.subr.bf16.mxu0 0
    %852 = vmatpush2.bf16.msra.mxu0 0
    %853 = vmatprep.subr.bf16.mxu0 0
    %854 = vmatpush2.bf16.msra.mxu0 0
    %855 = vmatprep.subr.bf16.mxu0 0
    %856 = vmatpush2.bf16.msra.mxu0 0
    %857 = vmatprep.subr.bf16.mxu0 0
    %858 = vmatpush2.bf16.msra.mxu0 0
    %859 = vmatprep.mubr.bf16.mxu0 0
    %860 = vmatmul.mubr.bf16.gmra.mxu0 %v826
    %v861 = vpop.f32.mrf.mxu0
    %v862 = vadd.f32 0.0, %v861
    %v863 = vpop.f32.mrf.mxu0
    %v864 = vadd.f32 0.0, %v863
    %v865 = vpop.f32.mrf.mxu0
    %v866 = vpop.f32.mrf.mxu0
    %867 = vdwg.mxu0
    %868 = vmatprep.subr.bf16.mxu0 0
    %869 = vmatpush1.bf16.msra.mxu0 %v576
    %870 = vmatprep.subr.bf16.mxu0 0
    %871 = vmatpush1.bf16.msra.mxu0 %v573
    %872 = vmatprep.subr.bf16.mxu0 0
    %873 = vmatpush1.bf16.msra.mxu0 %v570
    %874 = vmatprep.subr.bf16.mxu0 0
    %875 = vmatpush1.bf16.msra.mxu0 %v567
    %876 = vmatprep.subr.bf16.mxu0 0
    %877 = vmatpush1.bf16.msra.mxu0 %v564
    %878 = vmatprep.subr.bf16.mxu0 0
    %879 = vmatpush1.bf16.msra.mxu0 %v561
    %880 = vmatprep.subr.bf16.mxu0 0
    %881 = vmatpush1.bf16.msra.mxu0 %v558
    %882 = vmatprep.subr.bf16.mxu0 0
    %883 = vmatpush1.bf16.msra.mxu0 %v555
    %884 = vmatprep.subr.bf16.mxu0 0
    %885 = vmatpush2.bf16.msra.mxu0 0
    %886 = vmatprep.subr.bf16.mxu0 0
    %887 = vmatpush2.bf16.msra.mxu0 0
    %888 = vmatprep.subr.bf16.mxu0 0
    %889 = vmatpush2.bf16.msra.mxu0 0
    %890 = vmatprep.subr.bf16.mxu0 0
    %891 = vmatpush2.bf16.msra.mxu0 0
    %892 = vmatprep.subr.bf16.mxu0 0
    %893 = vmatpush2.bf16.msra.mxu0 0
    %894 = vmatprep.subr.bf16.mxu0 0
    %895 = vmatpush2.bf16.msra.mxu0 0
    %896 = vmatprep.subr.bf16.mxu0 0
    %897 = vmatpush2.bf16.msra.mxu0 0
    %898 = vmatprep.subr.bf16.mxu0 0
    %899 = vmatpush2.bf16.msra.mxu0 0
    %900 = vmatprep.mubr.bf16.mxu0 0
    %901 = vmatmul.mubr.bf16.gmra.mxu0 %v826
    %v902 = vpop.f32.mrf.mxu0
    %v903 = vadd.f32 0.0, %v902
    %v904 = vpop.f32.mrf.mxu0
    %v905 = vpop.f32.mrf.mxu0
    %v906 = vpop.f32.mrf.mxu0
    %907 = vdwg.mxu0
    %v908 = vadd.f32 %v823, %v862
    %v909 = vxor.u32 %v908, 2147483648
    %v910 = vmul.f32 %v909, 1.442695
    %v911 = vpow.pop %v910
    %v912 = vadd.f32 %v911, 1.0
    %v913 = vrcp.pop %v912
    %v914 = vmul.f32 1.0, %v913
    %v915 = vadd.f32 %v824, %v864
    %v916 = vxor.u32 %v915, 2147483648
    %v917 = vmul.f32 %v916, 1.442695
    %v918 = vpow.pop %v917
    %v919 = vadd.f32 %v918, 1.0
    %v920 = vrcp.pop %v919
    %v921 = vmul.f32 1.0, %v920
    %v922 = vadd.f32 %v903, %v700
    %v923 = vmul.f32 %v914, %v922
    %v924 = vadd.f32 %v825, %v923
    %v925 = vtanh.pop %v924
    %v926 = vsub.f32 1.0, %v921
    %v927 = vmul.f32 %v926, %v925
    %v928 = vmul.f32 %v921, %v819
    %v929 = vadd.f32 %v927, %v928
    %s930 = smul.u32 3, 3
    %s931 = smul.addr %s930, 8
    %s932 = scalar_lea.vmem [#allocation2], %s931
    %v933 = vld [vmem:[%s932] sm:$0xff]
    %v934 = vld [vmem:[%s932 + $0x8] sm:$0xff]
    %v935 = vld [vmem:[%s932 + $0x10] sm:$0xff]
    %v936 = vpack.c.bf16 %v929, %v929
    %937 = vmatprep.subr.bf16.mxu0 %v575
    %938 = vmatpush1.bf16.msra.mxu0 %v574
    %939 = vmatprep.subr.bf16.mxu0 %v572
    %940 = vmatpush1.bf16.msra.mxu0 %v571
    %941 = vmatprep.subr.bf16.mxu0 %v569
    %942 = vmatpush1.bf16.msra.mxu0 %v568
    %943 = vmatprep.subr.bf16.mxu0 %v566
    %944 = vmatpush1.bf16.msra.mxu0 %v565
    %945 = vmatprep.subr.bf16.mxu0 %v563
    %946 = vmatpush1.bf16.msra.mxu0 %v562
    %947 = vmatprep.subr.bf16.mxu0 %v560
    %948 = vmatpush1.bf16.msra.mxu0 %v559
    %949 = vmatprep.subr.bf16.mxu0 %v557
    %950 = vmatpush1.bf16.msra.mxu0 %v556
    %951 = vmatprep.subr.bf16.mxu0 %v554
    %952 = vmatpush1.bf16.msra.mxu0 %v553
    %953 = vmatprep.subr.bf16.mxu0 0
    %954 = vmatpush2.bf16.msra.mxu0 0
    %955 = vmatprep.subr.bf16.mxu0 0
    %956 = vmatpush2.bf16.msra.mxu0 0
    %957 = vmatprep.subr.bf16.mxu0 0
    %958 = vmatpush2.bf16.msra.mxu0 0
    %959 = vmatprep.subr.bf16.mxu0 0
    %960 = vmatpush2.bf16.msra.mxu0 0
    %961 = vmatprep.subr.bf16.mxu0 0
    %962 = vmatpush2.bf16.msra.mxu0 0
    %963 = vmatprep.subr.bf16.mxu0 0
    %964 = vmatpush2.bf16.msra.mxu0 0
    %965 = vmatprep.subr.bf16.mxu0 0
    %966 = vmatpush2.bf16.msra.mxu0 0
    %967 = vmatprep.subr.bf16.mxu0 0
    %968 = vmatpush2.bf16.msra.mxu0 0
    %969 = vmatprep.mubr.bf16.mxu0 0
    %970 = vmatmul.mubr.bf16.gmra.mxu0 %v936
    %v971 = vpop.f32.mrf.mxu0
    %v972 = vadd.f32 0.0, %v971
    %v973 = vpop.f32.mrf.mxu0
    %v974 = vadd.f32 0.0, %v973
    %v975 = vpop.f32.mrf.mxu0
    %v976 = vpop.f32.mrf.mxu0
    %977 = vdwg.mxu0
    %978 = vmatprep.subr.bf16.mxu0 0
    %979 = vmatpush1.bf16.msra.mxu0 %v576
    %980 = vmatprep.subr.bf16.mxu0 0
    %981 = vmatpush1.bf16.msra.mxu0 %v573
    %982 = vmatprep.subr.bf16.mxu0 0
    %983 = vmatpush1.bf16.msra.mxu0 %v570
    %984 = vmatprep.subr.bf16.mxu0 0
    %985 = vmatpush1.bf16.msra.mxu0 %v567
    %986 = vmatprep.subr.bf16.mxu0 0
    %987 = vmatpush1.bf16.msra.mxu0 %v564
    %988 = vmatprep.subr.bf16.mxu0 0
    %989 = vmatpush1.bf16.msra.mxu0 %v561
    %990 = vmatprep.subr.bf16.mxu0 0
    %991 = vmatpush1.bf16.msra.mxu0 %v558
    %992 = vmatprep.subr.bf16.mxu0 0
    %993 = vmatpush1.bf16.msra.mxu0 %v555
    %994 = vmatprep.subr.bf16.mxu0 0
    %995 = vmatpush2.bf16.msra.mxu0 0
    %996 = vmatprep.subr.bf16.mxu0 0
    %997 = vmatpush2.bf16.msra.mxu0 0
    %998 = vmatprep.subr.bf16.mxu0 0
    %999 = vmatpush2.bf16.msra.mxu0 0
    %1000 = vmatprep.subr.bf16.mxu0 0
    %1001 = vmatpush2.bf16.msra.mxu0 0
    %1002 = vmatprep.subr.bf16.mxu0 0
    %1003 = vmatpush2.bf16.msra.mxu0 0
    %1004 = vmatprep.subr.bf16.mxu0 0
    %1005 = vmatpush2.bf16.msra.mxu0 0
    %1006 = vmatprep.subr.bf16.mxu0 0
    %1007 = vmatpush2.bf16.msra.mxu0 0
    %1008 = vmatprep.subr.bf16.mxu0 0
    %1009 = vmatpush2.bf16.msra.mxu0 0
    %1010 = vmatprep.mubr.bf16.mxu0 0
    %1011 = vmatmul.mubr.bf16.gmra.mxu0 %v936
    %v1012 = vpop.f32.mrf.mxu0
    %v1013 = vadd.f32 0.0, %v1012
    %v1014 = vpop.f32.mrf.mxu0
    %v1015 = vpop.f32.mrf.mxu0
    %v1016 = vpop.f32.mrf.mxu0
    %1017 = vdwg.mxu0
    %v1018 = vadd.f32 %v933, %v972
    %v1019 = vxor.u32 %v1018, 2147483648
    %v1020 = vmul.f32 %v1019, 1.442695
    %v1021 = vpow.pop %v1020
    %v1022 = vadd.f32 %v1021, 1.0
    %v1023 = vrcp.pop %v1022
    %v1024 = vmul.f32 1.0, %v1023
    %v1025 = vadd.f32 %v934, %v974
    %v1026 = vxor.u32 %v1025, 2147483648
    %v1027 = vmul.f32 %v1026, 1.442695
    %v1028 = vpow.pop %v1027
    %v1029 = vadd.f32 %v1028, 1.0
    %v1030 = vrcp.pop %v1029
    %v1031 = vmul.f32 1.0, %v1030
    %v1032 = vadd.f32 %v1013, %v700
    %v1033 = vmul.f32 %v1024, %v1032
    %v1034 = vadd.f32 %v935, %v1033
    %v1035 = vtanh.pop %v1034
    %v1036 = vsub.f32 1.0, %v1031
    %v1037 = vmul.f32 %v1036, %v1035
    %v1038 = vmul.f32 %v1031, %v929
    %v1039 = vadd.f32 %v1037, %v1038
    %s1040 = smul.u32 4, 3
    %s1041 = smul.addr %s1040, 8
    %s1042 = scalar_lea.vmem [#allocation2], %s1041
    %v1043 = vld [vmem:[%s1042] sm:$0xff]
    %v1044 = vld [vmem:[%s1042 + $0x8] sm:$0xff]
    %v1045 = vld [vmem:[%s1042 + $0x10] sm:$0xff]
    %v1046 = vpack.c.bf16 %v1039, %v1039
    %1047 = vmatprep.subr.bf16.mxu0 %v575
    %1048 = vmatpush1.bf16.msra.mxu0 %v574
    %1049 = vmatprep.subr.bf16.mxu0 %v572
    %1050 = vmatpush1.bf16.msra.mxu0 %v571
    %1051 = vmatprep.subr.bf16.mxu0 %v569
    %1052 = vmatpush1.bf16.msra.mxu0 %v568
    %1053 = vmatprep.subr.bf16.mxu0 %v566
    %1054 = vmatpush1.bf16.msra.mxu0 %v565
    %1055 = vmatprep.subr.bf16.mxu0 %v563
    %1056 = vmatpush1.bf16.msra.mxu0 %v562
    %1057 = vmatprep.subr.bf16.mxu0 %v560
    %1058 = vmatpush1.bf16.msra.mxu0 %v559
    %1059 = vmatprep.subr.bf16.mxu0 %v557
    %1060 = vmatpush1.bf16.msra.mxu0 %v556
    %1061 = vmatprep.subr.bf16.mxu0 %v554
    %1062 = vmatpush1.bf16.msra.mxu0 %v553
    %1063 = vmatprep.subr.bf16.mxu0 0
    %1064 = vmatpush2.bf16.msra.mxu0 0
    %1065 = vmatprep.subr.bf16.mxu0 0
    %1066 = vmatpush2.bf16.msra.mxu0 0
    %1067 = vmatprep.subr.bf16.mxu0 0
    %1068 = vmatpush2.bf16.msra.mxu0 0
    %1069 = vmatprep.subr.bf16.mxu0 0
    %1070 = vmatpush2.bf16.msra.mxu0 0
    %1071 = vmatprep.subr.bf16.mxu0 0
    %1072 = vmatpush2.bf16.msra.mxu0 0
    %1073 = vmatprep.subr.bf16.mxu0 0
    %1074 = vmatpush2.bf16.msra.mxu0 0
    %1075 = vmatprep.subr.bf16.mxu0 0
    %1076 = vmatpush2.bf16.msra.mxu0 0
    %1077 = vmatprep.subr.bf16.mxu0 0
    %1078 = vmatpush2.bf16.msra.mxu0 0
    %1079 = vmatprep.mubr.bf16.mxu0 0
    %1080 = vmatmul.mubr.bf16.gmra.mxu0 %v1046
    %v1081 = vpop.f32.mrf.mxu0
    %v1082 = vadd.f32 0.0, %v1081
    %v1083 = vpop.f32.mrf.mxu0
    %v1084 = vadd.f32 0.0, %v1083
    %v1085 = vpop.f32.mrf.mxu0
    %v1086 = vpop.f32.mrf.mxu0
    %1087 = vdwg.mxu0
    %1088 = vmatprep.subr.bf16.mxu0 0
    %1089 = vmatpush1.bf16.msra.mxu0 %v576
    %1090 = vmatprep.subr.bf16.mxu0 0
    %1091 = vmatpush1.bf16.msra.mxu0 %v573
    %1092 = vmatprep.subr.bf16.mxu0 0
    %1093 = vmatpush1.bf16.msra.mxu0 %v570
    %1094 = vmatprep.subr.bf16.mxu0 0
    %1095 = vmatpush1.bf16.msra.mxu0 %v567
    %1096 = vmatprep.subr.bf16.mxu0 0
    %1097 = vmatpush1.bf16.msra.mxu0 %v564
    %1098 = vmatprep.subr.bf16.mxu0 0
    %1099 = vmatpush1.bf16.msra.mxu0 %v561
    %1100 = vmatprep.subr.bf16.mxu0 0
    %1101 = vmatpush1.bf16.msra.mxu0 %v558
    %1102 = vmatprep.subr.bf16.mxu0 0
    %1103 = vmatpush1.bf16.msra.mxu0 %v555
    %1104 = vmatprep.subr.bf16.mxu0 0
    %1105 = vmatpush2.bf16.msra.mxu0 0
    %1106 = vmatprep.subr.bf16.mxu0 0
    %1107 = vmatpush2.bf16.msra.mxu0 0
    %1108 = vmatprep.subr.bf16.mxu0 0
    %1109 = vmatpush2.bf16.msra.mxu0 0
    %1110 = vmatprep.subr.bf16.mxu0 0
    %1111 = vmatpush2.bf16.msra.mxu0 0
    %1112 = vmatprep.subr.bf16.mxu0 0
    %1113 = vmatpush2.bf16.msra.mxu0 0
    %1114 = vmatprep.subr.bf16.mxu0 0
    %1115 = vmatpush2.bf16.msra.mxu0 0
    %1116 = vmatprep.subr.bf16.mxu0 0
    %1117 = vmatpush2.bf16.msra.mxu0 0
    %1118 = vmatprep.subr.bf16.mxu0 0
    %1119 = vmatpush2.bf16.msra.mxu0 0
    %1120 = vmatprep.mubr.bf16.mxu0 0
    %1121 = vmatmul.mubr.bf16.gmra.mxu0 %v1046
    %v1122 = vpop.f32.mrf.mxu0
    %v1123 = vadd.f32 0.0, %v1122
    %v1124 = vpop.f32.mrf.mxu0
    %v1125 = vpop.f32.mrf.mxu0
    %v1126 = vpop.f32.mrf.mxu0
    %1127 = vdwg.mxu0
    %v1128 = vadd.f32 %v1043, %v1082
    %v1129 = vxor.u32 %v1128, 2147483648
    %v1130 = vmul.f32 %v1129, 1.442695
    %v1131 = vpow.pop %v1130
    %v1132 = vadd.f32 %v1131, 1.0
    %v1133 = vrcp.pop %v1132
    %v1134 = vmul.f32 1.0, %v1133
    %v1135 = vadd.f32 %v1044, %v1084
    %v1136 = vxor.u32 %v1135, 2147483648
    %v1137 = vmul.f32 %v1136, 1.442695
    %v1138 = vpow.pop %v1137
    %v1139 = vadd.f32 %v1138, 1.0
    %v1140 = vrcp.pop %v1139
    %v1141 = vmul.f32 1.0, %v1140
    %v1142 = vadd.f32 %v1123, %v700
    %v1143 = vmul.f32 %v1134, %v1142
    %v1144 = vadd.f32 %v1045, %v1143
    %v1145 = vtanh.pop %v1144
    %v1146 = vsub.f32 1.0, %v1141
    %v1147 = vmul.f32 %v1146, %v1145
    %v1148 = vmul.f32 %v1141, %v1039
    %v1149 = vadd.f32 %v1147, %v1148
    %s1150 = smul.u32 5, 3
    %s1151 = smul.addr %s1150, 8
    %s1152 = scalar_lea.vmem [#allocation2], %s1151
    %v1153 = vld [vmem:[%s1152] sm:$0xff]
    %v1154 = vld [vmem:[%s1152 + $0x8] sm:$0xff]
    %v1155 = vld [vmem:[%s1152 + $0x10] sm:$0xff]
    %v1156 = vpack.c.bf16 %v1149, %v1149
    %1157 = vmatprep.subr.bf16.mxu0 %v575
    %1158 = vmatpush1.bf16.msra.mxu0 %v574
    %1159 = vmatprep.subr.bf16.mxu0 %v572
    %1160 = vmatpush1.bf16.msra.mxu0 %v571
    %1161 = vmatprep.subr.bf16.mxu0 %v569
    %1162 = vmatpush1.bf16.msra.mxu0 %v568
    %1163 = vmatprep.subr.bf16.mxu0 %v566
    %1164 = vmatpush1.bf16.msra.mxu0 %v565
    %1165 = vmatprep.subr.bf16.mxu0 %v563
    %1166 = vmatpush1.bf16.msra.mxu0 %v562
    %1167 = vmatprep.subr.bf16.mxu0 %v560
    %1168 = vmatpush1.bf16.msra.mxu0 %v559
    %1169 = vmatprep.subr.bf16.mxu0 %v557
    %1170 = vmatpush1.bf16.msra.mxu0 %v556
    %1171 = vmatprep.subr.bf16.mxu0 %v554
    %1172 = vmatpush1.bf16.msra.mxu0 %v553
    %1173 = vmatprep.subr.bf16.mxu0 0
    %1174 = vmatpush2.bf16.msra.mxu0 0
    %1175 = vmatprep.subr.bf16.mxu0 0
    %1176 = vmatpush2.bf16.msra.mxu0 0
    %1177 = vmatprep.subr.bf16.mxu0 0
    %1178 = vmatpush2.bf16.msra.mxu0 0
    %1179 = vmatprep.subr.bf16.mxu0 0
    %1180 = vmatpush2.bf16.msra.mxu0 0
    %1181 = vmatprep.subr.bf16.mxu0 0
    %1182 = vmatpush2.bf16.msra.mxu0 0
    %1183 = vmatprep.subr.bf16.mxu0 0
    %1184 = vmatpush2.bf16.msra.mxu0 0
    %1185 = vmatprep.subr.bf16.mxu0 0
    %1186 = vmatpush2.bf16.msra.mxu0 0
    %1187 = vmatprep.subr.bf16.mxu0 0
    %1188 = vmatpush2.bf16.msra.mxu0 0
    %1189 = vmatprep.mubr.bf16.mxu0 0
    %1190 = vmatmul.mubr.bf16.gmra.mxu0 %v1156
    %v1191 = vpop.f32.mrf.mxu0
    %v1192 = vadd.f32 0.0, %v1191
    %v1193 = vpop.f32.mrf.mxu0
    %v1194 = vadd.f32 0.0, %v1193
    %v1195 = vpop.f32.mrf.mxu0
    %v1196 = vpop.f32.mrf.mxu0
    %1197 = vdwg.mxu0
    %1198 = vmatprep.subr.bf16.mxu0 0
    %1199 = vmatpush1.bf16.msra.mxu0 %v576
    %1200 = vmatprep.subr.bf16.mxu0 0
    %1201 = vmatpush1.bf16.msra.mxu0 %v573
    %1202 = vmatprep.subr.bf16.mxu0 0
    %1203 = vmatpush1.bf16.msra.mxu0 %v570
    %1204 = vmatprep.subr.bf16.mxu0 0
    %1205 = vmatpush1.bf16.msra.mxu0 %v567
    %1206 = vmatprep.subr.bf16.mxu0 0
    %1207 = vmatpush1.bf16.msra.mxu0 %v564
    %1208 = vmatprep.subr.bf16.mxu0 0
    %1209 = vmatpush1.bf16.msra.mxu0 %v561
    %1210 = vmatprep.subr.bf16.mxu0 0
    %1211 = vmatpush1.bf16.msra.mxu0 %v558
    %1212 = vmatprep.subr.bf16.mxu0 0
    %1213 = vmatpush1.bf16.msra.mxu0 %v555
    %1214 = vmatprep.subr.bf16.mxu0 0
    %1215 = vmatpush2.bf16.msra.mxu0 0
    %1216 = vmatprep.subr.bf16.mxu0 0
    %1217 = vmatpush2.bf16.msra.mxu0 0
    %1218 = vmatprep.subr.bf16.mxu0 0
    %1219 = vmatpush2.bf16.msra.mxu0 0
    %1220 = vmatprep.subr.bf16.mxu0 0
    %1221 = vmatpush2.bf16.msra.mxu0 0
    %1222 = vmatprep.subr.bf16.mxu0 0
    %1223 = vmatpush2.bf16.msra.mxu0 0
    %1224 = vmatprep.subr.bf16.mxu0 0
    %1225 = vmatpush2.bf16.msra.mxu0 0
    %1226 = vmatprep.subr.bf16.mxu0 0
    %1227 = vmatpush2.bf16.msra.mxu0 0
    %1228 = vmatprep.subr.bf16.mxu0 0
    %1229 = vmatpush2.bf16.msra.mxu0 0
    %1230 = vmatprep.mubr.bf16.mxu0 0
    %1231 = vmatmul.mubr.bf16.gmra.mxu0 %v1156
    %v1232 = vpop.f32.mrf.mxu0
    %v1233 = vadd.f32 0.0, %v1232
    %v1234 = vpop.f32.mrf.mxu0
    %v1235 = vpop.f32.mrf.mxu0
    %v1236 = vpop.f32.mrf.mxu0
    %1237 = vdwg.mxu0
    %v1238 = vadd.f32 %v1153, %v1192
    %v1239 = vxor.u32 %v1238, 2147483648
    %v1240 = vmul.f32 %v1239, 1.442695
    %v1241 = vpow.pop %v1240
    %v1242 = vadd.f32 %v1241, 1.0
    %v1243 = vrcp.pop %v1242
    %v1244 = vmul.f32 1.0, %v1243
    %v1245 = vadd.f32 %v1154, %v1194
    %v1246 = vxor.u32 %v1245, 2147483648
    %v1247 = vmul.f32 %v1246, 1.442695
    %v1248 = vpow.pop %v1247
    %v1249 = vadd.f32 %v1248, 1.0
    %v1250 = vrcp.pop %v1249
    %v1251 = vmul.f32 1.0, %v1250
    %v1252 = vadd.f32 %v1233, %v700
    %v1253 = vmul.f32 %v1244, %v1252
    %v1254 = vadd.f32 %v1155, %v1253
    %v1255 = vtanh.pop %v1254
    %v1256 = vsub.f32 1.0, %v1251
    %v1257 = vmul.f32 %v1256, %v1255
    %v1258 = vmul.f32 %v1251, %v1149
    %v1259 = vadd.f32 %v1257, %v1258
    %s1260 = smul.u32 6, 3
    %s1261 = smul.addr %s1260, 8
    %s1262 = scalar_lea.vmem [#allocation2], %s1261
    %v1263 = vld [vmem:[%s1262] sm:$0xff]
    %v1264 = vld [vmem:[%s1262 + $0x8] sm:$0xff]
    %v1265 = vld [vmem:[%s1262 + $0x10] sm:$0xff]
    %v1266 = vpack.c.bf16 %v1259, %v1259
    %1267 = vmatprep.subr.bf16.mxu0 %v575
    %1268 = vmatpush1.bf16.msra.mxu0 %v574
    %1269 = vmatprep.subr.bf16.mxu0 %v572
    %1270 = vmatpush1.bf16.msra.mxu0 %v571
    %1271 = vmatprep.subr.bf16.mxu0 %v569
    %1272 = vmatpush1.bf16.msra.mxu0 %v568
    %1273 = vmatprep.subr.bf16.mxu0 %v566
    %1274 = vmatpush1.bf16.msra.mxu0 %v565
    %1275 = vmatprep.subr.bf16.mxu0 %v563
    %1276 = vmatpush1.bf16.msra.mxu0 %v562
    %1277 = vmatprep.subr.bf16.mxu0 %v560
    %1278 = vmatpush1.bf16.msra.mxu0 %v559
    %1279 = vmatprep.subr.bf16.mxu0 %v557
    %1280 = vmatpush1.bf16.msra.mxu0 %v556
    %1281 = vmatprep.subr.bf16.mxu0 %v554
    %1282 = vmatpush1.bf16.msra.mxu0 %v553
    %1283 = vmatprep.subr.bf16.mxu0 0
    %1284 = vmatpush2.bf16.msra.mxu0 0
    %1285 = vmatprep.subr.bf16.mxu0 0
    %1286 = vmatpush2.bf16.msra.mxu0 0
    %1287 = vmatprep.subr.bf16.mxu0 0
    %1288 = vmatpush2.bf16.msra.mxu0 0
    %1289 = vmatprep.subr.bf16.mxu0 0
    %1290 = vmatpush2.bf16.msra.mxu0 0
    %1291 = vmatprep.subr.bf16.mxu0 0
    %1292 = vmatpush2.bf16.msra.mxu0 0
    %1293 = vmatprep.subr.bf16.mxu0 0
    %1294 = vmatpush2.bf16.msra.mxu0 0
    %1295 = vmatprep.subr.bf16.mxu0 0
    %1296 = vmatpush2.bf16.msra.mxu0 0
    %1297 = vmatprep.subr.bf16.mxu0 0
    %1298 = vmatpush2.bf16.msra.mxu0 0
    %1299 = vmatprep.mubr.bf16.mxu0 0
    %1300 = vmatmul.mubr.bf16.gmra.mxu0 %v1266
    %v1301 = vpop.f32.mrf.mxu0
    %v1302 = vadd.f32 0.0, %v1301
    %v1303 = vpop.f32.mrf.mxu0
    %v1304 = vadd.f32 0.0, %v1303
    %v1305 = vpop.f32.mrf.mxu0
    %v1306 = vpop.f32.mrf.mxu0
    %1307 = vdwg.mxu0
    %1308 = vmatprep.subr.bf16.mxu0 0
    %1309 = vmatpush1.bf16.msra.mxu0 %v576
    %1310 = vmatprep.subr.bf16.mxu0 0
    %1311 = vmatpush1.bf16.msra.mxu0 %v573
    %1312 = vmatprep.subr.bf16.mxu0 0
    %1313 = vmatpush1.bf16.msra.mxu0 %v570
    %1314 = vmatprep.subr.bf16.mxu0 0
    %1315 = vmatpush1.bf16.msra.mxu0 %v567
    %1316 = vmatprep.subr.bf16.mxu0 0
    %1317 = vmatpush1.bf16.msra.mxu0 %v564
    %1318 = vmatprep.subr.bf16.mxu0 0
    %1319 = vmatpush1.bf16.msra.mxu0 %v561
    %1320 = vmatprep.subr.bf16.mxu0 0
    %1321 = vmatpush1.bf16.msra.mxu0 %v558
    %1322 = vmatprep.subr.bf16.mxu0 0
    %1323 = vmatpush1.bf16.msra.mxu0 %v555
    %1324 = vmatprep.subr.bf16.mxu0 0
    %1325 = vmatpush2.bf16.msra.mxu0 0
    %1326 = vmatprep.subr.bf16.mxu0 0
    %1327 = vmatpush2.bf16.msra.mxu0 0
    %1328 = vmatprep.subr.bf16.mxu0 0
    %1329 = vmatpush2.bf16.msra.mxu0 0
    %1330 = vmatprep.subr.bf16.mxu0 0
    %1331 = vmatpush2.bf16.msra.mxu0 0
    %1332 = vmatprep.subr.bf16.mxu0 0
    %1333 = vmatpush2.bf16.msra.mxu0 0
    %1334 = vmatprep.subr.bf16.mxu0 0
    %1335 = vmatpush2.bf16.msra.mxu0 0
    %1336 = vmatprep.subr.bf16.mxu0 0
    %1337 = vmatpush2.bf16.msra.mxu0 0
    %1338 = vmatprep.subr.bf16.mxu0 0
    %1339 = vmatpush2.bf16.msra.mxu0 0
    %1340 = vmatprep.mubr.bf16.mxu0 0
    %1341 = vmatmul.mubr.bf16.gmra.mxu0 %v1266
    %v1342 = vpop.f32.mrf.mxu0
    %v1343 = vadd.f32 0.0, %v1342
    %v1344 = vpop.f32.mrf.mxu0
    %v1345 = vpop.f32.mrf.mxu0
    %v1346 = vpop.f32.mrf.mxu0
    %1347 = vdwg.mxu0
    %v1348 = vadd.f32 %v1263, %v1302
    %v1349 = vxor.u32 %v1348, 2147483648
    %v1350 = vmul.f32 %v1349, 1.442695
    %v1351 = vpow.pop %v1350
    %v1352 = vadd.f32 %v1351, 1.0
    %v1353 = vrcp.pop %v1352
    %v1354 = vmul.f32 1.0, %v1353
    %v1355 = vadd.f32 %v1264, %v1304
    %v1356 = vxor.u32 %v1355, 2147483648
    %v1357 = vmul.f32 %v1356, 1.442695
    %v1358 = vpow.pop %v1357
    %v1359 = vadd.f32 %v1358, 1.0
    %v1360 = vrcp.pop %v1359
    %v1361 = vmul.f32 1.0, %v1360
    %v1362 = vadd.f32 %v1343, %v700
    %v1363 = vmul.f32 %v1354, %v1362
    %v1364 = vadd.f32 %v1265, %v1363
    %v1365 = vtanh.pop %v1364
    %v1366 = vsub.f32 1.0, %v1361
    %v1367 = vmul.f32 %v1366, %v1365
    %v1368 = vmul.f32 %v1361, %v1259
    %v1369 = vadd.f32 %v1367, %v1368
    %s1370 = smul.u32 7, 3
    %s1371 = smul.addr %s1370, 8
    %s1372 = scalar_lea.vmem [#allocation2], %s1371
    %v1373 = vld [vmem:[%s1372] sm:$0xff]
    %v1374 = vld [vmem:[%s1372 + $0x8] sm:$0xff]
    %v1375 = vld [vmem:[%s1372 + $0x10] sm:$0xff]
    %v1376 = vpack.c.bf16 %v1369, %v1369
    %1377 = vmatprep.subr.bf16.mxu0 %v575
    %1378 = vmatpush1.bf16.msra.mxu0 %v574
    %1379 = vmatprep.subr.bf16.mxu0 %v572
    %1380 = vmatpush1.bf16.msra.mxu0 %v571
    %1381 = vmatprep.subr.bf16.mxu0 %v569
    %1382 = vmatpush1.bf16.msra.mxu0 %v568
    %1383 = vmatprep.subr.bf16.mxu0 %v566
    %1384 = vmatpush1.bf16.msra.mxu0 %v565
    %1385 = vmatprep.subr.bf16.mxu0 %v563
    %1386 = vmatpush1.bf16.msra.mxu0 %v562
    %1387 = vmatprep.subr.bf16.mxu0 %v560
    %1388 = vmatpush1.bf16.msra.mxu0 %v559
    %1389 = vmatprep.subr.bf16.mxu0 %v557
    %1390 = vmatpush1.bf16.msra.mxu0 %v556
    %1391 = vmatprep.subr.bf16.mxu0 %v554
    %1392 = vmatpush1.bf16.msra.mxu0 %v553
    %1393 = vmatprep.subr.bf16.mxu0 0
    %1394 = vmatpush2.bf16.msra.mxu0 0
    %1395 = vmatprep.subr.bf16.mxu0 0
    %1396 = vmatpush2.bf16.msra.mxu0 0
    %1397 = vmatprep.subr.bf16.mxu0 0
    %1398 = vmatpush2.bf16.msra.mxu0 0
    %1399 = vmatprep.subr.bf16.mxu0 0
    %1400 = vmatpush2.bf16.msra.mxu0 0
    %1401 = vmatprep.subr.bf16.mxu0 0
    %1402 = vmatpush2.bf16.msra.mxu0 0
    %1403 = vmatprep.subr.bf16.mxu0 0
    %1404 = vmatpush2.bf16.msra.mxu0 0
    %1405 = vmatprep.subr.bf16.mxu0 0
    %1406 = vmatpush2.bf16.msra.mxu0 0
    %1407 = vmatprep.subr.bf16.mxu0 0
    %1408 = vmatpush2.bf16.msra.mxu0 0
    %1409 = vmatprep.mubr.bf16.mxu0 0
    %1410 = vmatmul.mubr.bf16.gmra.mxu0 %v1376
    %v1411 = vpop.f32.mrf.mxu0
    %v1412 = vadd.f32 0.0, %v1411
    %v1413 = vpop.f32.mrf.mxu0
    %v1414 = vadd.f32 0.0, %v1413
    %v1415 = vpop.f32.mrf.mxu0
    %v1416 = vpop.f32.mrf.mxu0
    %1417 = vdwg.mxu0
    %1418 = vmatprep.subr.bf16.mxu0 0
    %1419 = vmatpush1.bf16.msra.mxu0 %v576
    %1420 = vmatprep.subr.bf16.mxu0 0
    %1421 = vmatpush1.bf16.msra.mxu0 %v573
    %1422 = vmatprep.subr.bf16.mxu0 0
    %1423 = vmatpush1.bf16.msra.mxu0 %v570
    %1424 = vmatprep.subr.bf16.mxu0 0
    %1425 = vmatpush1.bf16.msra.mxu0 %v567
    %1426 = vmatprep.subr.bf16.mxu0 0
    %1427 = vmatpush1.bf16.msra.mxu0 %v564
    %1428 = vmatprep.subr.bf16.mxu0 0
    %1429 = vmatpush1.bf16.msra.mxu0 %v561
    %1430 = vmatprep.subr.bf16.mxu0 0
    %1431 = vmatpush1.bf16.msra.mxu0 %v558
    %1432 = vmatprep.subr.bf16.mxu0 0
    %1433 = vmatpush1.bf16.msra.mxu0 %v555
    %1434 = vmatprep.subr.bf16.mxu0 0
    %1435 = vmatpush2.bf16.msra.mxu0 0
    %1436 = vmatprep.subr.bf16.mxu0 0
    %1437 = vmatpush2.bf16.msra.mxu0 0
    %1438 = vmatprep.subr.bf16.mxu0 0
    %1439 = vmatpush2.bf16.msra.mxu0 0
    %1440 = vmatprep.subr.bf16.mxu0 0
    %1441 = vmatpush2.bf16.msra.mxu0 0
    %1442 = vmatprep.subr.bf16.mxu0 0
    %1443 = vmatpush2.bf16.msra.mxu0 0
    %1444 = vmatprep.subr.bf16.mxu0 0
    %1445 = vmatpush2.bf16.msra.mxu0 0
    %1446 = vmatprep.subr.bf16.mxu0 0
    %1447 = vmatpush2.bf16.msra.mxu0 0
    %1448 = vmatprep.subr.bf16.mxu0 0
    %1449 = vmatpush2.bf16.msra.mxu0 0
    %1450 = vmatprep.mubr.bf16.mxu0 0
    %1451 = vmatmul.mubr.bf16.gmra.mxu0 %v1376
    %v1452 = vpop.f32.mrf.mxu0
    %v1453 = vadd.f32 0.0, %v1452
    %v1454 = vpop.f32.mrf.mxu0
    %v1455 = vpop.f32.mrf.mxu0
    %v1456 = vpop.f32.mrf.mxu0
    %1457 = vdwg.mxu0
    %v1458 = vadd.f32 %v1373, %v1412
    %v1459 = vxor.u32 %v1458, 2147483648
    %v1460 = vmul.f32 %v1459, 1.442695
    %v1461 = vpow.pop %v1460
    %v1462 = vadd.f32 %v1461, 1.0
    %v1463 = vrcp.pop %v1462
    %v1464 = vmul.f32 1.0, %v1463
    %v1465 = vadd.f32 %v1374, %v1414
    %v1466 = vxor.u32 %v1465, 2147483648
    %v1467 = vmul.f32 %v1466, 1.442695
    %v1468 = vpow.pop %v1467
    %v1469 = vadd.f32 %v1468, 1.0
    %v1470 = vrcp.pop %v1469
    %v1471 = vmul.f32 1.0, %v1470
    %v1472 = vadd.f32 %v1453, %v700
    %v1473 = vmul.f32 %v1464, %v1472
    %v1474 = vadd.f32 %v1375, %v1473
    %v1475 = vtanh.pop %v1474
    %v1476 = vsub.f32 1.0, %v1471
    %v1477 = vmul.f32 %v1476, %v1475
    %v1478 = vmul.f32 %v1471, %v1369
    %v1479 = vadd.f32 %v1477, %v1478
    %1480 = vst [vmem:[#allocation9] sm:$0xff] %v1479
    // Predicated region
    $region34: #{tpu_custom_call.1} parent=1 // pred_check
      _
    $region35: #{tpu_custom_call.1} parent=1 // pred_check_branch
      %1482 = sbr.rel (0) target = $region37
    $region36: #{tpu_custom_call.1} parent=1 // pred_region
      %s1484 = ssub.s32 128, 128
      %1485 = vsyncadd [#allocation5], %s1484
      %s1487 = sshll.u32 [#allocation9], 4
      %s1488 = int_to_ptr.vmem [resolvable:$true] %s1487
      %1490 = dma.vmem_to_hbm [thread:$0]  %s1488, 128, %s5, [#allocation5]
    $region37: #{tpu_custom_call.1} parent=1 // pred_fallthru
      _
    // Predicated region
    $region38: #{tpu_custom_call.1} parent=1 // pred_check
      _
    $region39: #{tpu_custom_call.1} parent=1 // pred_check_branch
      %1492 = sbr.rel (0) target = $region41
    $region40: #{tpu_custom_call.1} parent=1 // pred_region
      %1493 = dma.done [#allocation5], 128
    $region41: #{tpu_custom_call.1} parent=1 // pred_fallthru
      _
    %1494 = vsyncpa [#allocation4], 1
    %1495 = vsyncpa [#allocation7], 1
    %1496 = vsyncpa [#allocation5], 1

</llo_original>
